<compile_context>
chip_gen: v7x
topology: tpu7x:2x2x1
jax: 0.10.0
libtpu: 0.0.40
codegen_flags: <defaults>
</compile_context>

<pallas_src>
import functools

import jax
import jax.numpy as jnp
from jax import lax
from jax.experimental import pallas as pl
from jax.experimental.pallas import tpu as pltpu

LANES = 128
NEG_INF = -1e30


def _lane_pad(n):
    """Round n up to a multiple of the 128-lane vreg width."""
    return pl.cdiv(n, LANES) * LANES


def _gat_fused_kernel(x_ref, adj_ref, wbig_ref, wsrc_ref, b_ref, out_ref, *,
                      heads, fout, negative_slope,
                      apply_input_relu, apply_log_softmax):
    """All-heads GATConv: one MXU transform, per-head masked softmax, aggregate."""
    hf = heads * fout

    x = x_ref[...].astype(jnp.float32)                         # [N, Fin]
    if apply_input_relu:                                        # fused F.relu of prev layer
        x = jnp.maximum(x, 0.0)

    # One MXU pass: per-head transformed features + per-node destination scores.
    z = jnp.dot(x, wbig_ref[...],
                preferred_element_type=jnp.float32)             # [N, HF + H]
    xh = z[:, :hf]                                              # [N, H*Fout]
    s_dst = z[:, hf:hf + heads]                                 # [N, H]

    # Source scores for all heads in one batched dot (result already row-major
    # [H, N], so no in-kernel transpose is needed).
    s_src_t = lax.dot_general(wsrc_ref[...], x, (((1,), (1,)), ((), ())),
                              preferred_element_type=jnp.float32)   # [H, N]

    # 0/1 adjacency mask (dst x src), bf16 in HBM.  Self-loops guarantee every
    # destination row has at least one valid entry, so the -1e30 masked softmax
    # is always well defined.
    mask = adj_ref[...] > 0                                     # [N, N] bool

    head_outs = []
    for h in range(heads):                                      # tiny, fully unrolled
        e = s_dst[:, h:h + 1] + s_src_t[h:h + 1, :]             # e[i,j]=a_dst.x_i + a_src.x_j
        e = jnp.where(e > 0, e, negative_slope * e)             # LeakyReLU(0.2)
        e = jnp.where(mask, e, NEG_INF)                         # mask non-edges
        m = jnp.max(e, axis=-1, keepdims=True)
        p = jnp.exp(e - m)
        denom = jnp.sum(p, axis=-1, keepdims=True)
        alpha = p * pl.reciprocal(denom, approx=True)           # EUP, not VALU divide
        head_outs.append(
            jnp.dot(alpha, xh[:, h * fout:(h + 1) * fout],
                    preferred_element_type=jnp.float32))        # [N, Fout]  (MXU)

    out = (head_outs[0] if heads == 1
           else jnp.concatenate(head_outs, axis=-1))            # [N, H*Fout]
    out = out + b_ref[...]                                      # per-head bias (flattened)

    if apply_log_softmax:                                       # fused F.log_softmax(dim=1)
        m2 = jnp.max(out, axis=-1, keepdims=True)
        s = out - m2
        out = s - jnp.log(jnp.sum(jnp.exp(s), axis=-1, keepdims=True))

    # Lane-dense store: pad the feature dim up to a 128-lane multiple.
    n = out.shape[0]
    pad = out_ref.shape[-1] - hf
    if pad > 0:
        out = jnp.concatenate([out, jnp.zeros((n, pad), jnp.float32)], axis=-1)
    out_ref[...] = out


def _pack_params(w, a_src, a_dst, bias, fin_pad=None):
    """Pack per-head parameters for the fused kernel (plain-JAX parameter prep).

    Returns:
      wbig  : [Fin(_pad), H*Fout + H]  = [ W per head | W_h @ a_dst_h ]
      wsrc_t: [H, Fin(_pad)]           rows = W_h @ a_src_h
      b_flat: [1, H*Fout]
    """
    H, Fin, Fout = w.shape
    w_cat = jnp.transpose(w, (1, 0, 2)).reshape(Fin, H * Fout)      # heads on lanes
    w_dst = jnp.einsum('hif,hf->ih', w, a_dst[:, 0, :])             # [Fin, H]
    wbig = jnp.concatenate([w_cat, w_dst], axis=1)                  # [Fin, HF+H]
    wsrc_t = jnp.einsum('hif,hf->hi', w, a_src[:, 0, :])            # [H, Fin]
    if fin_pad is not None and fin_pad > Fin:
        pad = fin_pad - Fin
        wbig = jnp.concatenate(
            [wbig, jnp.zeros((pad, wbig.shape[1]), wbig.dtype)], axis=0)
        wsrc_t = jnp.concatenate(
            [wsrc_t, jnp.zeros((H, pad), wsrc_t.dtype)], axis=1)
    b_flat = bias.reshape(1, H * Fout)
    return wbig, wsrc_t, b_flat


def gat_conv_fused(x, adj, wbig, wsrc_t, b_flat, *, heads, fout,
                   apply_input_relu=False, apply_log_softmax=False):
    """One fused GATConv layer. Returns a lane-padded [N, round_up(H*Fout, 128)] slab."""
    N = x.shape[0]
    out_w = _lane_pad(heads * fout)
    kernel = functools.partial(
        _gat_fused_kernel, heads=heads, fout=fout, negative_slope=0.2,
        apply_input_relu=apply_input_relu, apply_log_softmax=apply_log_softmax)
    # Single invocation, no grid: every operand is a whole-array VMEM block
    # (default BlockSpecs), so there is no per-step pipeline overhead.
    return pl.pallas_call(
        kernel,
        out_shape=jax.ShapeDtypeStruct((N, out_w), jnp.float32),
    )(x, adj, wbig, wsrc_t, b_flat)


def init_gat_params(key, features, heads, classes, hidden):
    keys = jax.random.split(key, 6)

    def glorot(k, shape, fan_in, fan_out):
        lim = (6.0 / (fan_in + fan_out)) ** 0.5
        return jax.random.uniform(k, shape, jnp.float32, -lim, lim)

    return {
        # layer 1: GATConv(features, hidden, heads) -> concat -> [N, heads*hidden]
        "W1": glorot(keys[0], (heads, features, hidden), features, heads * hidden),
        "a_src1": glorot(keys[1], (heads, 1, hidden), hidden, 1),
        "a_dst1": glorot(keys[2], (heads, 1, hidden), hidden, 1),
        "b1": jnp.zeros((heads, 1, hidden), jnp.float32),
        # layer 2: GATConv(heads*hidden, classes)  (heads=1 default) -> [N, classes]
        "W2": glorot(keys[3], (1, heads * hidden, classes), heads * hidden, classes),
        "a_src2": glorot(keys[4], (1, 1, classes), classes, 1),
        "a_dst2": glorot(keys[5], (1, 1, classes), classes, 1),
        "b2": jnp.zeros((1, 1, classes), jnp.float32),
    }


def gat_forward(params, x, adj):
    H, _, hidden = params["W1"].shape
    _, fin2, classes = params["W2"].shape          # fin2 == H * hidden
    N = x.shape[0]

    wbig1, wsrc1, b1 = _pack_params(params["W1"], params["a_src1"],
                                    params["a_dst1"], params["b1"])
    # Layer 1 emits a [N, 128]-lane-padded slab; layer 2's packed weights are
    # zero-padded along Fin so they consume that slab directly (no reshape glue).
    wbig2, wsrc2, b2 = _pack_params(params["W2"], params["a_src2"],
                                    params["a_dst2"], params["b2"],
                                    fin_pad=_lane_pad(fin2))

    h = gat_conv_fused(x, adj, wbig1, wsrc1, b1, heads=H, fout=hidden)
    out = gat_conv_fused(h, adj, wbig2, wsrc2, b2, heads=1, fout=classes,
                         apply_input_relu=True,       # fused F.relu(layer-1 output)
                         apply_log_softmax=True)      # fused F.log_softmax(dim=1)
    return out[:, :classes]                           # strip lane padding


if __name__ == "__main__":
    # small, module-consistent sizes
    N, features, heads, classes, hidden = 32, 16, 4, 8, 8
    dropout = 0.5  # train-only in GATConv; eval-mode forward implemented

    key = jax.random.PRNGKey(0)
    kx, ke, kp = jax.random.split(key, 3)

    # data.x : [N, features]
    x = jax.random.normal(kx, (N, features), jnp.float32)
    # data.edge_index : [2, E]  (row 0 = source, row 1 = target); densified to adj
    E = 96
    edge_index = jax.random.randint(ke, (2, E), 0, N)
    src, dst = edge_index[0], edge_index[1]
    adj = jnp.zeros((N, N), jnp.float32).at[dst, src].set(1.0)
    adj = adj.at[jnp.arange(N), jnp.arange(N)].set(1.0)   # add self-loops (PyG default)
    adj = adj.astype(jnp.bfloat16)                        # 0/1 mask only -> narrow dtype

    params = init_gat_params(kp, features, heads, classes, hidden)

    out = jax.jit(gat_forward)(params, x, adj)
    out = jax.block_until_ready(out)
    assert out.shape == (N, classes) and out.dtype == jnp.float32
    print("KERNEL_OK")
</pallas_src>

<mosaic_0001>
module attributes {stable_mosaic.version = 11 : i64} {
  func.func @_gat_fused_kernel(%arg0: memref<32x128xf32, #tpu.memory_space<vmem>>, %arg1: memref<32x32xbf16, #tpu.memory_space<vmem>>, %arg2: memref<128x9xf32, #tpu.memory_space<vmem>>, %arg3: memref<1x128xf32, #tpu.memory_space<vmem>>, %arg4: memref<1x8xf32, #tpu.memory_space<vmem>>, %arg5: memref<32x128xf32, #tpu.memory_space<vmem>>) attributes {dimension_semantics = [], scalar_prefetch = 0 : i64, scratch_operands = 0 : i64, tpu.core_type = #tpu.core_type<tc>} {
    %c0 = arith.constant 0 : index
    %c0_0 = arith.constant 0 : index
    %0 = vector.load %arg0[%c0, %c0_0] : memref<32x128xf32, #tpu.memory_space<vmem>>, vector<32x128xf32>
    %cst = arith.constant 0.000000e+00 : f32
    %1 = vector.broadcast %cst : f32 to vector<32x128xf32>
    %2 = arith.maximumf %0, %1 : vector<32x128xf32>
    %c0_1 = arith.constant 0 : index
    %c0_2 = arith.constant 0 : index
    %3 = vector.load %arg2[%c0_1, %c0_2] : memref<128x9xf32, #tpu.memory_space<vmem>>, vector<128x9xf32>
    %cst_3 = arith.constant dense<0.000000e+00> : vector<32x9xf32>
    %4 = tpu.matmul %2, %3, %cst_3 {dimension_numbers = #tpu.dot_dimension_numbers<[1], [0], [0], [1], [0, 0, 1, 1], [], []>} : vector<32x128xf32>, vector<128x9xf32>, vector<32x9xf32> -> vector<32x9xf32>
    %5 = vector.extract_strided_slice %4 {offsets = [0, 0], sizes = [32, 8], strides = [1, 1]} : vector<32x9xf32> to vector<32x8xf32>
    %6 = vector.extract_strided_slice %4 {offsets = [0, 8], sizes = [32, 1], strides = [1, 1]} : vector<32x9xf32> to vector<32x1xf32>
    %c0_4 = arith.constant 0 : index
    %c0_5 = arith.constant 0 : index
    %7 = vector.load %arg3[%c0_4, %c0_5] : memref<1x128xf32, #tpu.memory_space<vmem>>, vector<1x128xf32>
    %cst_6 = arith.constant dense<0.000000e+00> : vector<1x32xf32>
    %8 = tpu.matmul %7, %2, %cst_6 {dimension_numbers = #tpu.dot_dimension_numbers<[1], [1], [0], [0], [0, 0, 1, 0], [], []>} : vector<1x128xf32>, vector<32x128xf32>, vector<1x32xf32> -> vector<1x32xf32>
    %c0_7 = arith.constant 0 : index
    %c0_8 = arith.constant 0 : index
    %9 = vector.load %arg1[%c0_7, %c0_8] : memref<32x32xbf16, #tpu.memory_space<vmem>>, vector<32x32xbf16>
    %cst_9 = arith.constant 0.000000e+00 : bf16
    %10 = vector.broadcast %cst_9 : bf16 to vector<32x32xbf16>
    %11 = arith.cmpf ogt, %9, %10 : vector<32x32xbf16>
    %12 = vector.broadcast %6 : vector<32x1xf32> to vector<32x32xf32>
    %13 = vector.broadcast %8 : vector<1x32xf32> to vector<32x32xf32>
    %14 = arith.addf %12, %13 : vector<32x32xf32>
    %cst_10 = arith.constant 0.000000e+00 : f32
    %15 = vector.broadcast %cst_10 : f32 to vector<32x32xf32>
    %16 = arith.cmpf ogt, %14, %15 : vector<32x32xf32>
    %cst_11 = arith.constant 2.000000e-01 : f32
    %17 = vector.broadcast %cst_11 : f32 to vector<32x32xf32>
    %18 = arith.mulf %17, %14 : vector<32x32xf32>
    %19 = arith.select %16, %14, %18 : vector<32x32xi1>, vector<32x32xf32>
    %cst_12 = arith.constant -1.000000e+30 : f32
    %20 = vector.broadcast %cst_12 : f32 to vector<32x32xf32>
    %21 = arith.select %11, %19, %20 : vector<32x32xi1>, vector<32x32xf32>
    %cst_13 = arith.constant dense<0xFF800000> : vector<32xf32>
    %22 = vector.multi_reduction <maximumf>, %21, %cst_13 [1] : vector<32x32xf32> to vector<32xf32>
    %23 = vector.shape_cast %22 : vector<32xf32> to vector<32x1xf32>
    %24 = vector.broadcast %23 : vector<32x1xf32> to vector<32x32xf32>
    %25 = arith.subf %21, %24 : vector<32x32xf32>
    %26 = math.exp %25 : vector<32x32xf32>
    %cst_14 = arith.constant dense<0.000000e+00> : vector<32xf32>
    %27 = vector.multi_reduction <add>, %26, %cst_14 [1] : vector<32x32xf32> to vector<32xf32>
    %28 = vector.shape_cast %27 : vector<32xf32> to vector<32x1xf32>
    %29 = tpu.reciprocal %28 {approx = true} : vector<32x1xf32> -> vector<32x1xf32>
    %30 = vector.broadcast %29 : vector<32x1xf32> to vector<32x32xf32>
    %31 = arith.mulf %26, %30 : vector<32x32xf32>
    %cst_15 = arith.constant dense<0.000000e+00> : vector<32x8xf32>
    %32 = tpu.matmul %31, %5, %cst_15 {dimension_numbers = #tpu.dot_dimension_numbers<[1], [0], [0], [1], [0, 0, 1, 1], [], []>} : vector<32x32xf32>, vector<32x8xf32>, vector<32x8xf32> -> vector<32x8xf32>
    %c0_16 = arith.constant 0 : index
    %c0_17 = arith.constant 0 : index
    %33 = vector.load %arg4[%c0_16, %c0_17] : memref<1x8xf32, #tpu.memory_space<vmem>>, vector<1x8xf32>
    %34 = vector.broadcast %33 : vector<1x8xf32> to vector<32x8xf32>
    %35 = arith.addf %32, %34 : vector<32x8xf32>
    %cst_18 = arith.constant dense<0xFF800000> : vector<32xf32>
    %36 = vector.multi_reduction <maximumf>, %35, %cst_18 [1] : vector<32x8xf32> to vector<32xf32>
    %37 = vector.shape_cast %36 : vector<32xf32> to vector<32x1xf32>
    %38 = vector.broadcast %37 : vector<32x1xf32> to vector<32x8xf32>
    %39 = arith.subf %35, %38 : vector<32x8xf32>
    %40 = math.exp %39 : vector<32x8xf32>
    %cst_19 = arith.constant dense<0.000000e+00> : vector<32xf32>
    %41 = vector.multi_reduction <add>, %40, %cst_19 [1] : vector<32x8xf32> to vector<32xf32>
    %42 = vector.shape_cast %41 : vector<32xf32> to vector<32x1xf32>
    %43 = math.log %42 : vector<32x1xf32>
    %44 = vector.broadcast %43 : vector<32x1xf32> to vector<32x8xf32>
    %45 = arith.subf %39, %44 : vector<32x8xf32>
    %cst_20 = arith.constant 0.000000e+00 : f32
    %46 = vector.broadcast %cst_20 : f32 to vector<32x120xf32>
    %47 = tpu.concatenate %45, %46 in 1 : vector<32x8xf32>, vector<32x120xf32> -> vector<32x128xf32>
    %c0_21 = arith.constant 0 : index
    %c0_22 = arith.constant 0 : index
    %48 = vector.load %arg5[%c0_21, %c0_22] : memref<32x128xf32, #tpu.memory_space<vmem>>, vector<32x128xf32>
    tpu.vector_store %arg5[%c0_21, %c0_22], %47 {strides = array<i32>} : memref<32x128xf32, #tpu.memory_space<vmem>>, vector<32x128xf32>,
    return
  }
}

module attributes {stable_mosaic.version = 11 : i64} {
  func.func @_gat_fused_kernel(%arg0: memref<32x16xf32, #tpu.memory_space<vmem>>, %arg1: memref<32x32xbf16, #tpu.memory_space<vmem>>, %arg2: memref<16x36xf32, #tpu.memory_space<vmem>>, %arg3: memref<4x16xf32, #tpu.memory_space<vmem>>, %arg4: memref<1x32xf32, #tpu.memory_space<vmem>>, %arg5: memref<32x128xf32, #tpu.memory_space<vmem>>) attributes {dimension_semantics = [], scalar_prefetch = 0 : i64, scratch_operands = 0 : i64, tpu.core_type = #tpu.core_type<tc>} {
    %c0 = arith.constant 0 : index
    %c0_0 = arith.constant 0 : index
    %0 = vector.load %arg0[%c0, %c0_0] : memref<32x16xf32, #tpu.memory_space<vmem>>, vector<32x16xf32>
    %c0_1 = arith.constant 0 : index
    %c0_2 = arith.constant 0 : index
    %1 = vector.load %arg2[%c0_1, %c0_2] : memref<16x36xf32, #tpu.memory_space<vmem>>, vector<16x36xf32>
    %cst = arith.constant dense<0.000000e+00> : vector<32x36xf32>
    %2 = tpu.matmul %0, %1, %cst {dimension_numbers = #tpu.dot_dimension_numbers<[1], [0], [0], [1], [0, 0, 1, 1], [], []>} : vector<32x16xf32>, vector<16x36xf32>, vector<32x36xf32> -> vector<32x36xf32>
    %3 = vector.extract_strided_slice %2 {offsets = [0, 0], sizes = [32, 32], strides = [1, 1]} : vector<32x36xf32> to vector<32x32xf32>
    %4 = vector.extract_strided_slice %2 {offsets = [0, 32], sizes = [32, 4], strides = [1, 1]} : vector<32x36xf32> to vector<32x4xf32>
    %c0_3 = arith.constant 0 : index
    %c0_4 = arith.constant 0 : index
    %5 = vector.load %arg3[%c0_3, %c0_4] : memref<4x16xf32, #tpu.memory_space<vmem>>, vector<4x16xf32>
    %cst_5 = arith.constant dense<0.000000e+00> : vector<4x32xf32>
    %6 = tpu.matmul %5, %0, %cst_5 {dimension_numbers = #tpu.dot_dimension_numbers<[1], [1], [0], [0], [0, 0, 1, 0], [], []>} : vector<4x16xf32>, vector<32x16xf32>, vector<4x32xf32> -> vector<4x32xf32>
    %c0_6 = arith.constant 0 : index
    %c0_7 = arith.constant 0 : index
    %7 = vector.load %arg1[%c0_6, %c0_7] : memref<32x32xbf16, #tpu.memory_space<vmem>>, vector<32x32xbf16>
    %cst_8 = arith.constant 0.000000e+00 : bf16
    %8 = vector.broadcast %cst_8 : bf16 to vector<32x32xbf16>
    %9 = arith.cmpf ogt, %7, %8 : vector<32x32xbf16>
    %10 = vector.extract_strided_slice %4 {offsets = [0, 0], sizes = [32, 1], strides = [1, 1]} : vector<32x4xf32> to vector<32x1xf32>
    %11 = vector.extract_strided_slice %6 {offsets = [0, 0], sizes = [1, 32], strides = [1, 1]} : vector<4x32xf32> to vector<1x32xf32>
    %12 = vector.broadcast %10 : vector<32x1xf32> to vector<32x32xf32>
    %13 = vector.broadcast %11 : vector<1x32xf32> to vector<32x32xf32>
    %14 = arith.addf %12, %13 : vector<32x32xf32>
    %cst_9 = arith.constant 0.000000e+00 : f32
    %15 = vector.broadcast %cst_9 : f32 to vector<32x32xf32>
    %16 = arith.cmpf ogt, %14, %15 : vector<32x32xf32>
    %cst_10 = arith.constant 2.000000e-01 : f32
    %17 = vector.broadcast %cst_10 : f32 to vector<32x32xf32>
    %18 = arith.mulf %17, %14 : vector<32x32xf32>
    %19 = arith.select %16, %14, %18 : vector<32x32xi1>, vector<32x32xf32>
    %cst_11 = arith.constant -1.000000e+30 : f32
    %20 = vector.broadcast %cst_11 : f32 to vector<32x32xf32>
    %21 = arith.select %9, %19, %20 : vector<32x32xi1>, vector<32x32xf32>
    %cst_12 = arith.constant dense<0xFF800000> : vector<32xf32>
    %22 = vector.multi_reduction <maximumf>, %21, %cst_12 [1] : vector<32x32xf32> to vector<32xf32>
    %23 = vector.shape_cast %22 : vector<32xf32> to vector<32x1xf32>
    %24 = vector.broadcast %23 : vector<32x1xf32> to vector<32x32xf32>
    %25 = arith.subf %21, %24 : vector<32x32xf32>
    %26 = math.exp %25 : vector<32x32xf32>
    %cst_13 = arith.constant dense<0.000000e+00> : vector<32xf32>
    %27 = vector.multi_reduction <add>, %26, %cst_13 [1] : vector<32x32xf32> to vector<32xf32>
    %28 = vector.shape_cast %27 : vector<32xf32> to vector<32x1xf32>
    %29 = tpu.reciprocal %28 {approx = true} : vector<32x1xf32> -> vector<32x1xf32>
    %30 = vector.broadcast %29 : vector<32x1xf32> to vector<32x32xf32>
    %31 = arith.mulf %26, %30 : vector<32x32xf32>
    %32 = vector.extract_strided_slice %3 {offsets = [0, 0], sizes = [32, 8], strides = [1, 1]} : vector<32x32xf32> to vector<32x8xf32>
    %cst_14 = arith.constant dense<0.000000e+00> : vector<32x8xf32>
    %33 = tpu.matmul %31, %32, %cst_14 {dimension_numbers = #tpu.dot_dimension_numbers<[1], [0], [0], [1], [0, 0, 1, 1], [], []>} : vector<32x32xf32>, vector<32x8xf32>, vector<32x8xf32> -> vector<32x8xf32>
    %34 = vector.extract_strided_slice %4 {offsets = [0, 1], sizes = [32, 1], strides = [1, 1]} : vector<32x4xf32> to vector<32x1xf32>
    %35 = vector.extract_strided_slice %6 {offsets = [1, 0], sizes = [1, 32], strides = [1, 1]} : vector<4x32xf32> to vector<1x32xf32>
    %36 = vector.broadcast %34 : vector<32x1xf32> to vector<32x32xf32>
    %37 = vector.broadcast %35 : vector<1x32xf32> to vector<32x32xf32>
    %38 = arith.addf %36, %37 : vector<32x32xf32>
    %cst_15 = arith.constant 0.000000e+00 : f32
    %39 = vector.broadcast %cst_15 : f32 to vector<32x32xf32>
    %40 = arith.cmpf ogt, %38, %39 : vector<32x32xf32>
    %cst_16 = arith.constant 2.000000e-01 : f32
    %41 = vector.broadcast %cst_16 : f32 to vector<32x32xf32>
    %42 = arith.mulf %41, %38 : vector<32x32xf32>
    %43 = arith.select %40, %38, %42 : vector<32x32xi1>, vector<32x32xf32>
    %cst_17 = arith.constant -1.000000e+30 : f32
    %44 = vector.broadcast %cst_17 : f32 to vector<32x32xf32>
    %45 = arith.select %9, %43, %44 : vector<32x32xi1>, vector<32x32xf32>
    %cst_18 = arith.constant dense<0xFF800000> : vector<32xf32>
    %46 = vector.multi_reduction <maximumf>, %45, %cst_18 [1] : vector<32x32xf32> to vector<32xf32>
    %47 = vector.shape_cast %46 : vector<32xf32> to vector<32x1xf32>
    %48 = vector.broadcast %47 : vector<32x1xf32> to vector<32x32xf32>
    %49 = arith.subf %45, %48 : vector<32x32xf32>
    %50 = math.exp %49 : vector<32x32xf32>
    %cst_19 = arith.constant dense<0.000000e+00> : vector<32xf32>
    %51 = vector.multi_reduction <add>, %50, %cst_19 [1] : vector<32x32xf32> to vector<32xf32>
    %52 = vector.shape_cast %51 : vector<32xf32> to vector<32x1xf32>
    %53 = tpu.reciprocal %52 {approx = true} : vector<32x1xf32> -> vector<32x1xf32>
    %54 = vector.broadcast %53 : vector<32x1xf32> to vector<32x32xf32>
    %55 = arith.mulf %50, %54 : vector<32x32xf32>
    %56 = vector.extract_strided_slice %3 {offsets = [0, 8], sizes = [32, 8], strides = [1, 1]} : vector<32x32xf32> to vector<32x8xf32>
    %cst_20 = arith.constant dense<0.000000e+00> : vector<32x8xf32>
    %57 = tpu.matmul %55, %56, %cst_20 {dimension_numbers = #tpu.dot_dimension_numbers<[1], [0], [0], [1], [0, 0, 1, 1], [], []>} : vector<32x32xf32>, vector<32x8xf32>, vector<32x8xf32> -> vector<32x8xf32>
    %58 = vector.extract_strided_slice %4 {offsets = [0, 2], sizes = [32, 1], strides = [1, 1]} : vector<32x4xf32> to vector<32x1xf32>
    %59 = vector.extract_strided_slice %6 {offsets = [2, 0], sizes = [1, 32], strides = [1, 1]} : vector<4x32xf32> to vector<1x32xf32>
    %60 = vector.broadcast %58 : vector<32x1xf32> to vector<32x32xf32>
    %61 = vector.broadcast %59 : vector<1x32xf32> to vector<32x32xf32>
    %62 = arith.addf %60, %61 : vector<32x32xf32>
    %cst_21 = arith.constant 0.000000e+00 : f32
    %63 = vector.broadcast %cst_21 : f32 to vector<32x32xf32>
    %64 = arith.cmpf ogt, %62, %63 : vector<32x32xf32>
    %cst_22 = arith.constant 2.000000e-01 : f32
    %65 = vector.broadcast %cst_22 : f32 to vector<32x32xf32>
    %66 = arith.mulf %65, %62 : vector<32x32xf32>
    %67 = arith.select %64, %62, %66 : vector<32x32xi1>, vector<32x32xf32>
    %cst_23 = arith.constant -1.000000e+30 : f32
    %68 = vector.broadcast %cst_23 : f32 to vector<32x32xf32>
    %69 = arith.select %9, %67, %68 : vector<32x32xi1>, vector<32x32xf32>
    %cst_24 = arith.constant dense<0xFF800000> : vector<32xf32>
    %70 = vector.multi_reduction <maximumf>, %69, %cst_24 [1] : vector<32x32xf32> to vector<32xf32>
    %71 = vector.shape_cast %70 : vector<32xf32> to vector<32x1xf32>
    %72 = vector.broadcast %71 : vector<32x1xf32> to vector<32x32xf32>
    %73 = arith.subf %69, %72 : vector<32x32xf32>
    %74 = math.exp %73 : vector<32x32xf32>
    %cst_25 = arith.constant dense<0.000000e+00> : vector<32xf32>
    %75 = vector.multi_reduction <add>, %74, %cst_25 [1] : vector<32x32xf32> to vector<32xf32>
    %76 = vector.shape_cast %75 : vector<32xf32> to vector<32x1xf32>
    %77 = tpu.reciprocal %76 {approx = true} : vector<32x1xf32> -> vector<32x1xf32>
    %78 = vector.broadcast %77 : vector<32x1xf32> to vector<32x32xf32>
    %79 = arith.mulf %74, %78 : vector<32x32xf32>
    %80 = vector.extract_strided_slice %3 {offsets = [0, 16], sizes = [32, 8], strides = [1, 1]} : vector<32x32xf32> to vector<32x8xf32>
    %cst_26 = arith.constant dense<0.000000e+00> : vector<32x8xf32>
    %81 = tpu.matmul %79, %80, %cst_26 {dimension_numbers = #tpu.dot_dimension_numbers<[1], [0], [0], [1], [0, 0, 1, 1], [], []>} : vector<32x32xf32>, vector<32x8xf32>, vector<32x8xf32> -> vector<32x8xf32>
    %82 = vector.extract_strided_slice %4 {offsets = [0, 3], sizes = [32, 1], strides = [1, 1]} : vector<32x4xf32> to vector<32x1xf32>
    %83 = vector.extract_strided_slice %6 {offsets = [3, 0], sizes = [1, 32], strides = [1, 1]} : vector<4x32xf32> to vector<1x32xf32>
    %84 = vector.broadcast %82 : vector<32x1xf32> to vector<32x32xf32>
    %85 = vector.broadcast %83 : vector<1x32xf32> to vector<32x32xf32>
    %86 = arith.addf %84, %85 : vector<32x32xf32>
    %cst_27 = arith.constant 0.000000e+00 : f32
    %87 = vector.broadcast %cst_27 : f32 to vector<32x32xf32>
    %88 = arith.cmpf ogt, %86, %87 : vector<32x32xf32>
    %cst_28 = arith.constant 2.000000e-01 : f32
    %89 = vector.broadcast %cst_28 : f32 to vector<32x32xf32>
    %90 = arith.mulf %89, %86 : vector<32x32xf32>
    %91 = arith.select %88, %86, %90 : vector<32x32xi1>, vector<32x32xf32>
    %cst_29 = arith.constant -1.000000e+30 : f32
    %92 = vector.broadcast %cst_29 : f32 to vector<32x32xf32>
    %93 = arith.select %9, %91, %92 : vector<32x32xi1>, vector<32x32xf32>
    %cst_30 = arith.constant dense<0xFF800000> : vector<32xf32>
    %94 = vector.multi_reduction <maximumf>, %93, %cst_30 [1] : vector<32x32xf32> to vector<32xf32>
    %95 = vector.shape_cast %94 : vector<32xf32> to vector<32x1xf32>
    %96 = vector.broadcast %95 : vector<32x1xf32> to vector<32x32xf32>
    %97 = arith.subf %93, %96 : vector<32x32xf32>
    %98 = math.exp %97 : vector<32x32xf32>
    %cst_31 = arith.constant dense<0.000000e+00> : vector<32xf32>
    %99 = vector.multi_reduction <add>, %98, %cst_31 [1] : vector<32x32xf32> to vector<32xf32>
    %100 = vector.shape_cast %99 : vector<32xf32> to vector<32x1xf32>
    %101 = tpu.reciprocal %100 {approx = true} : vector<32x1xf32> -> vector<32x1xf32>
    %102 = vector.broadcast %101 : vector<32x1xf32> to vector<32x32xf32>
    %103 = arith.mulf %98, %102 : vector<32x32xf32>
    %104 = vector.extract_strided_slice %3 {offsets = [0, 24], sizes = [32, 8], strides = [1, 1]} : vector<32x32xf32> to vector<32x8xf32>
    %cst_32 = arith.constant dense<0.000000e+00> : vector<32x8xf32>
    %105 = tpu.matmul %103, %104, %cst_32 {dimension_numbers = #tpu.dot_dimension_numbers<[1], [0], [0], [1], [0, 0, 1, 1], [], []>} : vector<32x32xf32>, vector<32x8xf32>, vector<32x8xf32> -> vector<32x8xf32>
    %106 = tpu.concatenate %33, %57, %81, %105 in 1 : vector<32x8xf32>, vector<32x8xf32>, vector<32x8xf32>, vector<32x8xf32> -> vector<32x32xf32>
    %c0_33 = arith.constant 0 : index
    %c0_34 = arith.constant 0 : index
    %107 = vector.load %arg4[%c0_33, %c0_34] : memref<1x32xf32, #tpu.memory_space<vmem>>, vector<1x32xf32>
    %108 = vector.broadcast %107 : vector<1x32xf32> to vector<32x32xf32>
    %109 = arith.addf %106, %108 : vector<32x32xf32>
    %cst_35 = arith.constant 0.000000e+00 : f32
    %110 = vector.broadcast %cst_35 : f32 to vector<32x96xf32>
    %111 = tpu.concatenate %109, %110 in 1 : vector<32x32xf32>, vector<32x96xf32> -> vector<32x128xf32>
    %c0_36 = arith.constant 0 : index
    %c0_37 = arith.constant 0 : index
    %112 = vector.load %arg5[%c0_36, %c0_37] : memref<32x128xf32, #tpu.memory_space<vmem>>, vector<32x128xf32>
    tpu.vector_store %arg5[%c0_36, %c0_37], %111 {strides = array<i32>} : memref<32x128xf32, #tpu.memory_space<vmem>>, vector<32x128xf32>,
    return
  }
}

</mosaic_0001>

<llo_original>
// kernel: gat_forward.3
$region0: #{gat_forward.3}
  #allocation0 [shape = 'u32[]', space=smem, size = 0x4, offset = 0x4, fixed_abs, tag = 'smem constant byte address 0x4 - core index']
  #allocation1 [shape = 'u32[144,128]{1,0:T(1,128)}', space=vmem, size = 0x12000, scoped, tag = 'internal scratch']
  %s0 = inlined_call_operand.vmem [shape: f32[32,128], index: 0, kind: input, shape index: {}]
  %s1 = inlined_call_operand.vmem [shape: bf16[32,32], index: 1, kind: input, shape index: {}]
  %s2 = inlined_call_operand.vmem [shape: f32[128,9], index: 2, kind: input, shape index: {}]
  %s3 = inlined_call_operand.vmem [shape: f32[1,128], index: 3, kind: input, shape index: {}]
  %s4 = inlined_call_operand.vmem [shape: f32[1,8], index: 4, kind: input, shape index: {}]
  %s5 = inlined_call_operand.vmem [shape: f32[32,128], index: 5, kind: output, shape index: {}]
  %s6 = sld [smem:[#allocation0]]
  $region30: #{gat_forward.3} parent=0
    _
  %s8 = ssub.s32 1, %s6
  %s9 = scalar_select 0, %s8, %s6
  // Predicated region
  $region2: #{gat_forward.3} parent=0 // pred_check
    _
  $region3: #{gat_forward.3} parent=0 // pred_check_branch
    %11 = sbr.rel (0) target = $region5
  $region4: #{gat_forward.3} parent=0 // pred_region
    _
  $region5: #{gat_forward.3} parent=0 // pred_fallthru
    _
  // Predicated region
  $region6: #{gat_forward.3} parent=0 // pred_check
    _
  $region7: #{gat_forward.3} parent=0 // pred_check_branch
    %13 = sbr.rel (0) target = $region9
  $region8: #{gat_forward.3} parent=0 // pred_region
    _
  $region9: #{gat_forward.3} parent=0 // pred_fallthru
    _
  // Predicated region
  $region10: #{gat_forward.3} parent=0 // pred_check
    _
  $region11: #{gat_forward.3} parent=0 // pred_check_branch
    %15 = sbr.rel (0) target = $region13
  $region12: #{gat_forward.3} parent=0 // pred_region
    _
  $region13: #{gat_forward.3} parent=0 // pred_fallthru
    _
  // Predicated region
  $region14: #{gat_forward.3} parent=0 // pred_check
    _
  $region15: #{gat_forward.3} parent=0 // pred_check_branch
    %17 = sbr.rel (0) target = $region17
  $region16: #{gat_forward.3} parent=0 // pred_region
    _
  $region17: #{gat_forward.3} parent=0 // pred_fallthru
    _
  // Predicated region
  $region18: #{gat_forward.3} parent=0 // pred_check
    _
  $region19: #{gat_forward.3} parent=0 // pred_check_branch
    %19 = sbr.rel (0) target = $region21
  $region20: #{gat_forward.3} parent=0 // pred_region
    _
  $region21: #{gat_forward.3} parent=0 // pred_fallthru
    _
  %v23 = vld [vmem:[%s0] sm:$0xff]
  %v24 = vld [vmem:[%s0 + $0x8] sm:$0xff]
  %v25 = vld [vmem:[%s0 + $0x10] sm:$0xff]
  %v26 = vld [vmem:[%s0 + $0x18] sm:$0xff]
  %v27 = vmax.f32 %v23, 0.0
  %v28 = vmax.f32 %v24, 0.0
  %v29 = vmax.f32 %v25, 0.0
  %v30 = vmax.f32 %v26, 0.0
  %v31 = vld [vmem:[%s2] sm:$0xff]
  %v32 = vld [vmem:[%s2 + $0x8] sm:$0xff]
  %v33 = vld [vmem:[%s2 + $0x10] sm:$0xff]
  %v34 = vld [vmem:[%s2 + $0x18] sm:$0xff]
  %v35 = vld [vmem:[%s2 + $0x20] sm:$0xff]
  %v36 = vld [vmem:[%s2 + $0x28] sm:$0xff]
  %v37 = vld [vmem:[%s2 + $0x30] sm:$0xff]
  %v38 = vld [vmem:[%s2 + $0x38] sm:$0xff]
  %v39 = vld [vmem:[%s2 + $0x40] sm:$0xff]
  %v40 = vld [vmem:[%s2 + $0x48] sm:$0xff]
  %v41 = vld [vmem:[%s2 + $0x50] sm:$0xff]
  %v42 = vld [vmem:[%s2 + $0x58] sm:$0xff]
  %v43 = vld [vmem:[%s2 + $0x60] sm:$0xff]
  %v44 = vld [vmem:[%s2 + $0x68] sm:$0xff]
  %v45 = vld [vmem:[%s2 + $0x70] sm:$0xff]
  %v46 = vld [vmem:[%s2 + $0x78] sm:$0xff]
  %47 = vmatprep.subr.mxu0 0.0
  %48 = vmatpush1.msra.mxu0 %v31
  %49 = vmatprep.subr.mxu0 0.0
  %50 = vmatpush1.msra.mxu0 %v32
  %51 = vmatprep.subr.mxu0 0.0
  %52 = vmatpush1.msra.mxu0 %v33
  %53 = vmatprep.subr.mxu0 0.0
  %54 = vmatpush1.msra.mxu0 %v34
  %55 = vmatprep.subr.mxu0 0.0
  %56 = vmatpush1.msra.mxu0 %v35
  %57 = vmatprep.subr.mxu0 0.0
  %58 = vmatpush1.msra.mxu0 %v36
  %59 = vmatprep.subr.mxu0 0.0
  %60 = vmatpush1.msra.mxu0 %v37
  %61 = vmatprep.subr.mxu0 0.0
  %62 = vmatpush1.msra.mxu0 %v38
  %63 = vmatprep.subr.mxu0 0.0
  %64 = vmatpush1.msra.mxu0 %v39
  %65 = vmatprep.subr.mxu0 0.0
  %66 = vmatpush1.msra.mxu0 %v40
  %67 = vmatprep.subr.mxu0 0.0
  %68 = vmatpush1.msra.mxu0 %v41
  %69 = vmatprep.subr.mxu0 0.0
  %70 = vmatpush1.msra.mxu0 %v42
  %71 = vmatprep.subr.mxu0 0.0
  %72 = vmatpush1.msra.mxu0 %v43
  %73 = vmatprep.subr.mxu0 0.0
  %74 = vmatpush1.msra.mxu0 %v44
  %75 = vmatprep.subr.mxu0 0.0
  %76 = vmatpush1.msra.mxu0 %v45
  %77 = vmatprep.subr.mxu0 0.0
  %78 = vmatpush1.msra.mxu0 %v46
  %79 = vmatprep.subr.mxu0 0.0
  %80 = vmatpush1.msra.mxu0 0.0
  %81 = vmatprep.subr.mxu0 0.0
  %82 = vmatpush1.msra.mxu0 0.0
  %83 = vmatprep.subr.mxu0 0.0
  %84 = vmatpush1.msra.mxu0 0.0
  %85 = vmatprep.subr.mxu0 0.0
  %86 = vmatpush1.msra.mxu0 0.0
  %87 = vmatprep.subr.mxu0 0.0
  %88 = vmatpush1.msra.mxu0 0.0
  %89 = vmatprep.subr.mxu0 0.0
  %90 = vmatpush1.msra.mxu0 0.0
  %91 = vmatprep.subr.mxu0 0.0
  %92 = vmatpush1.msra.mxu0 0.0
  %93 = vmatprep.subr.mxu0 0.0
  %94 = vmatpush1.msra.mxu0 0.0
  %95 = vmatprep.subr.mxu0 0.0
  %96 = vmatpush1.msra.mxu0 0.0
  %97 = vmatprep.subr.mxu0 0.0
  %98 = vmatpush1.msra.mxu0 0.0
  %99 = vmatprep.subr.mxu0 0.0
  %100 = vmatpush1.msra.mxu0 0.0
  %101 = vmatprep.subr.mxu0 0.0
  %102 = vmatpush1.msra.mxu0 0.0
  %103 = vmatprep.subr.mxu0 0.0
  %104 = vmatpush1.msra.mxu0 0.0
  %105 = vmatprep.subr.mxu0 0.0
  %106 = vmatpush1.msra.mxu0 0.0
  %107 = vmatprep.subr.mxu0 0.0
  %108 = vmatpush1.msra.mxu0 0.0
  %109 = vmatprep.subr.mxu0 0.0
  %110 = vmatpush1.msra.mxu0 0.0
  %111 = vmatprep.mubr.f32.mxu0 0.0
  %112 = vmatmul.mubr.f32.gmra.mrb[0].mxu0 %v27
  %v113 = vpop.f32.mrb[0].mxu0
  %v114 = vadd.f32 0.0, %v113
  %v115 = vpop.f32.mrb[0].mxu0
  %116 = vmatprep.mubr.f32.mxu0 0.0
  %117 = vmatmul.mubr.f32.gmra.mrb[0].mxu0 %v28
  %v118 = vpop.f32.mrb[0].mxu0
  %v119 = vadd.f32 0.0, %v118
  %v120 = vpop.f32.mrb[0].mxu0
  %121 = vmatprep.mubr.f32.mxu0 0.0
  %122 = vmatmul.mubr.f32.gmra.mrb[0].mxu0 %v29
  %v123 = vpop.f32.mrb[0].mxu0
  %v124 = vadd.f32 0.0, %v123
  %v125 = vpop.f32.mrb[0].mxu0
  %126 = vmatprep.mubr.f32.mxu0 0.0
  %127 = vmatmul.mubr.f32.gmra.mrb[0].mxu0 %v30
  %v128 = vpop.f32.mrb[0].mxu0
  %v129 = vadd.f32 0.0, %v128
  %v130 = vpop.f32.mrb[0].mxu0
  %131 = vdwg.mxu0
  %v132 = vld [vmem:[%s3] sm:$0x1]
  %133 = vmatprep.subr.mxu0 0.0
  %134 = vmatpush1.xpose.msra.mxu0 %v27
  %135 = vmatprep.subr.mxu0 0.0
  %136 = vmatpush1.xpose.msra.mxu0 %v28
  %137 = vmatprep.subr.mxu0 0.0
  %138 = vmatpush1.xpose.msra.mxu0 %v29
  %139 = vmatprep.subr.mxu0 0.0
  %140 = vmatpush1.xpose.msra.mxu0 %v30
  %141 = vmatprep.subr.mxu0 0.0
  %142 = vmatpush1.xpose.msra.mxu0 0.0
  %143 = vmatprep.subr.mxu0 0.0
  %144 = vmatpush1.xpose.msra.mxu0 0.0
  %145 = vmatprep.subr.mxu0 0.0
  %146 = vmatpush1.xpose.msra.mxu0 0.0
  %147 = vmatprep.subr.mxu0 0.0
  %148 = vmatpush1.xpose.msra.mxu0 0.0
  %149 = vmatprep.subr.mxu0 0.0
  %150 = vmatpush1.xpose.msra.mxu0 0.0
  %151 = vmatprep.subr.mxu0 0.0
  %152 = vmatpush1.xpose.msra.mxu0 0.0
  %153 = vmatprep.subr.mxu0 0.0
  %154 = vmatpush1.xpose.msra.mxu0 0.0
  %155 = vmatprep.subr.mxu0 0.0
  %156 = vmatpush1.xpose.msra.mxu0 0.0
  %157 = vmatprep.subr.mxu0 0.0
  %158 = vmatpush1.xpose.msra.mxu0 0.0
  %159 = vmatprep.subr.mxu0 0.0
  %160 = vmatpush1.xpose.msra.mxu0 0.0
  %161 = vmatprep.subr.mxu0 0.0
  %162 = vmatpush1.xpose.msra.mxu0 0.0
  %163 = vmatprep.subr.mxu0 0.0
  %164 = vmatpush1.xpose.msra.mxu0 0.0
  %165 = vmatprep.subr.mxu0 0.0
  %166 = vmatpush1.xpose.msra.mxu0 0.0
  %167 = vmatprep.subr.mxu0 0.0
  %168 = vmatpush1.xpose.msra.mxu0 0.0
  %169 = vmatprep.subr.mxu0 0.0
  %170 = vmatpush1.xpose.msra.mxu0 0.0
  %171 = vmatprep.subr.mxu0 0.0
  %172 = vmatpush1.xpose.msra.mxu0 0.0
  %173 = vmatprep.subr.mxu0 0.0
  %174 = vmatpush1.xpose.msra.mxu0 0.0
  %175 = vmatprep.subr.mxu0 0.0
  %176 = vmatpush1.xpose.msra.mxu0 0.0
  %177 = vmatprep.subr.mxu0 0.0
  %178 = vmatpush1.xpose.msra.mxu0 0.0
  %179 = vmatprep.subr.mxu0 0.0
  %180 = vmatpush1.xpose.msra.mxu0 0.0
  %181 = vmatprep.subr.mxu0 0.0
  %182 = vmatpush1.xpose.msra.mxu0 0.0
  %183 = vmatprep.subr.mxu0 0.0
  %184 = vmatpush1.xpose.msra.mxu0 0.0
  %185 = vmatprep.subr.mxu0 0.0
  %186 = vmatpush1.xpose.msra.mxu0 0.0
  %187 = vmatprep.subr.mxu0 0.0
  %188 = vmatpush1.xpose.msra.mxu0 0.0
  %189 = vmatprep.subr.mxu0 0.0
  %190 = vmatpush1.xpose.msra.mxu0 0.0
  %191 = vmatprep.subr.mxu0 0.0
  %192 = vmatpush1.xpose.msra.mxu0 0.0
  %193 = vmatprep.subr.mxu0 0.0
  %194 = vmatpush1.xpose.msra.mxu0 0.0
  %195 = vmatprep.subr.mxu0 0.0
  %196 = vmatpush1.xpose.msra.mxu0 0.0
  %197 = vmatprep.mubr.f32.mxu0 0.0
  %198 = vmatmul.mubr.f32.gmra.mrb[0].mxu0 %v132
  %v199 = vpop.f32.mrb[0].mxu0
  %v200 = vadd.f32 0.0, %v199
  %v201 = vpop.f32.mrb[0].mxu0
  %202 = vdwg.mxu0
  %v203 = vld [vmem:[%s1] sm:$0xf]
  %v204 = vld [vmem:[%s1 + $0x4] sm:$0xf]
  %v205 = vld [vmem:[%s1 + $0x8] sm:$0xf]
  %v206 = vld [vmem:[%s1 + $0xc] sm:$0xf]
  %vm207 = vcmp.gt.bf16.partialorder %v203, 0
  %vm208 = vcmp.gt.bf16.partialorder %v204, 0
  %vm209 = vcmp.gt.bf16.partialorder %v205, 0
  %vm210 = vcmp.gt.bf16.partialorder %v206, 0
  %212 = vset.pattern.permute.xlu0 8
  %213 = vperm.xlu0 %212, %v114
  %v214 = vpop.permute.xlu0 %213
  %217 = vset.pattern.permute.xlu0 8
  %218 = vperm.xlu0 %217, %v119
  %v219 = vpop.permute.xlu0 %218
  %222 = vset.pattern.permute.xlu0 8
  %223 = vperm.xlu0 %222, %v124
  %v224 = vpop.permute.xlu0 %223
  %227 = vset.pattern.permute.xlu0 8
  %228 = vperm.xlu0 %227, %v129
  %v229 = vpop.permute.xlu0 %228
  %v231 = vlaneseq
  %v232 = vshrl.u32 %v231, 7
  %v233 = vsub.s32 0, %v232
  %v234 = vrot.slane %v200, %v233
  %v235 = vadd.f32 %v214, %v234
  %v236 = vadd.f32 %v219, %v234
  %v237 = vadd.f32 %v224, %v234
  %v238 = vadd.f32 %v229, %v234
  %vm239 = vcmp.gt.f32.partialorder %v235, 0.0
  %vm240 = vcmp.gt.f32.partialorder %v236, 0.0
  %vm241 = vcmp.gt.f32.partialorder %v237, 0.0
  %vm242 = vcmp.gt.f32.partialorder %v238, 0.0
  %v243 = vmul.f32 %v235, 0.2
  %v244 = vmul.f32 %v236, 0.2
  %v245 = vmul.f32 %v237, 0.2
  %v246 = vmul.f32 %v238, 0.2
  %v247 = vsel %vm239, %v235, %v243
  %v248 = vsel %vm240, %v236, %v244
  %v249 = vsel %vm241, %v237, %v245
  %v250 = vsel %vm242, %v238, %v246
  %v251 = vsel %vm207, 65537, 0
  %v252 = vsel %vm208, 65537, 0
  %v253 = vsel %vm209, 65537, 0
  %v254 = vsel %vm210, 65537, 0
  %v255 = vunpack.c.l.b16 %v251
  %v256 = vunpack.c.l.b16 %v252
  %v257 = vunpack.c.l.b16 %v253
  %v258 = vunpack.c.l.b16 %v254
  %vm259 = vcmp.ne.s32.totalorder %v255, 0
  %vm260 = vcmp.ne.s32.totalorder %v256, 0
  %vm261 = vcmp.ne.s32.totalorder %v257, 0
  %vm262 = vcmp.ne.s32.totalorder %v258, 0
  %v263 = vsel %vm259, %v247, -1e+30
  %v264 = vsel %vm260, %v248, -1e+30
  %v265 = vsel %vm261, %v249, -1e+30
  %v266 = vsel %vm262, %v250, -1e+30
  %vm267 = vcmask 261120
  %v268 = vsel %vm267, %v263, -inf
  %269 = vmax.xlane.f32.xlu0 %v268
  %v270 = vpop.xlane.xlu0 %269
  %v271 = vsel %vm267, %v264, -inf
  %272 = vmax.xlane.f32.xlu0 %v271
  %v273 = vpop.xlane.xlu0 %272
  %v274 = vsel %vm267, %v265, -inf
  %275 = vmax.xlane.f32.xlu0 %v274
  %v276 = vpop.xlane.xlu0 %275
  %v277 = vsel %vm267, %v266, -inf
  %278 = vmax.xlane.f32.xlu0 %v277
  %v279 = vpop.xlane.xlu0 %278
  %v280 = vsub.f32 %v263, %v270
  %v281 = vsub.f32 %v264, %v273
  %v282 = vsub.f32 %v265, %v276
  %v283 = vsub.f32 %v266, %v279
  %v284 = vmul.f32 %v280, 1.442695
  %v285 = vpow.pop %v284
  %v286 = vmul.f32 %v281, 1.442695
  %v287 = vpow.pop %v286
  %v288 = vmul.f32 %v282, 1.442695
  %v289 = vpow.pop %v288
  %v290 = vmul.f32 %v283, 1.442695
  %v291 = vpow.pop %v290
  %v292 = vsel %vm267, %v285, 0.0
  %293 = vadd.xlane.f32.xlu0 %v292
  %v294 = vpop.xlane.xlu0 %293
  %v295 = vsel %vm267, %v287, 0.0
  %296 = vadd.xlane.f32.xlu0 %v295
  %v297 = vpop.xlane.xlu0 %296
  %v298 = vsel %vm267, %v289, 0.0
  %299 = vadd.xlane.f32.xlu0 %v298
  %v300 = vpop.xlane.xlu0 %299
  %v301 = vsel %vm267, %v291, 0.0
  %302 = vadd.xlane.f32.xlu0 %v301
  %v303 = vpop.xlane.xlu0 %302
  %v304 = vrcp.pop %v294
  %v305 = vrcp.pop %v297
  %v306 = vrcp.pop %v300
  %v307 = vrcp.pop %v303
  %v308 = vmul.f32 %v285, %v304
  %v309 = vmul.f32 %v287, %v305
  %v310 = vmul.f32 %v289, %v306
  %v311 = vmul.f32 %v291, %v307
  %v312 = vld [vmem:[%s4] sm:$0x1]
  %v314 = vlaneseq
  %v315 = vshrl.u32 %v314, 7
  %v316 = vsub.s32 0, %v315
  %v317 = vrot.slane %v312, %v316
  %v320 = vsel %vm267, %v308, 0
  %v323 = vsel %vm267, %v309, 0
  %v326 = vsel %vm267, %v310, 0
  %v329 = vsel %vm267, %v311, 0
  %331 = vmatprep.subr.mxu0 0.0
  %332 = vmatpush1.msra.mxu0 %v114
  %333 = vmatprep.subr.mxu0 0.0
  %334 = vmatpush1.msra.mxu0 %v119
  %335 = vmatprep.subr.mxu0 0.0
  %336 = vmatpush1.msra.mxu0 %v124
  %337 = vmatprep.subr.mxu0 0.0
  %338 = vmatpush1.msra.mxu0 %v129
  %339 = vmatprep.subr.mxu0 0.0
  %340 = vmatpush1.msra.mxu0 0.0
  %341 = vmatprep.subr.mxu0 0.0
  %342 = vmatpush1.msra.mxu0 0.0
  %343 = vmatprep.subr.mxu0 0.0
  %344 = vmatpush1.msra.mxu0 0.0
  %345 = vmatprep.subr.mxu0 0.0
  %346 = vmatpush1.msra.mxu0 0.0
  %347 = vmatprep.subr.mxu0 0.0
  %348 = vmatpush1.msra.mxu0 0.0
  %349 = vmatprep.subr.mxu0 0.0
  %350 = vmatpush1.msra.mxu0 0.0
  %351 = vmatprep.subr.mxu0 0.0
  %352 = vmatpush1.msra.mxu0 0.0
  %353 = vmatprep.subr.mxu0 0.0
  %354 = vmatpush1.msra.mxu0 0.0
  %355 = vmatprep.subr.mxu0 0.0
  %356 = vmatpush1.msra.mxu0 0.0
  %357 = vmatprep.subr.mxu0 0.0
  %358 = vmatpush1.msra.mxu0 0.0
  %359 = vmatprep.subr.mxu0 0.0
  %360 = vmatpush1.msra.mxu0 0.0
  %361 = vmatprep.subr.mxu0 0.0
  %362 = vmatpush1.msra.mxu0 0.0
  %363 = vmatprep.subr.mxu0 0.0
  %364 = vmatpush1.msra.mxu0 0.0
  %365 = vmatprep.subr.mxu0 0.0
  %366 = vmatpush1.msra.mxu0 0.0
  %367 = vmatprep.subr.mxu0 0.0
  %368 = vmatpush1.msra.mxu0 0.0
  %369 = vmatprep.subr.mxu0 0.0
  %370 = vmatpush1.msra.mxu0 0.0
  %371 = vmatprep.subr.mxu0 0.0
  %372 = vmatpush1.msra.mxu0 0.0
  %373 = vmatprep.subr.mxu0 0.0
  %374 = vmatpush1.msra.mxu0 0.0
  %375 = vmatprep.subr.mxu0 0.0
  %376 = vmatpush1.msra.mxu0 0.0
  %377 = vmatprep.subr.mxu0 0.0
  %378 = vmatpush1.msra.mxu0 0.0
  %379 = vmatprep.subr.mxu0 0.0
  %380 = vmatpush1.msra.mxu0 0.0
  %381 = vmatprep.subr.mxu0 0.0
  %382 = vmatpush1.msra.mxu0 0.0
  %383 = vmatprep.subr.mxu0 0.0
  %384 = vmatpush1.msra.mxu0 0.0
  %385 = vmatprep.subr.mxu0 0.0
  %386 = vmatpush1.msra.mxu0 0.0
  %387 = vmatprep.subr.mxu0 0.0
  %388 = vmatpush1.msra.mxu0 0.0
  %389 = vmatprep.subr.mxu0 0.0
  %390 = vmatpush1.msra.mxu0 0.0
  %391 = vmatprep.subr.mxu0 0.0
  %392 = vmatpush1.msra.mxu0 0.0
  %393 = vmatprep.subr.mxu0 0.0
  %394 = vmatpush1.msra.mxu0 0.0
  %395 = vmatprep.mubr.f32.mxu0 0.0
  %396 = vmatmul.mubr.f32.gmra.mrb[0].mxu0 %v320
  %v397 = vpop.f32.mrb[0].mxu0
  %v398 = vadd.f32 %v317, %v397
  %v399 = vpop.f32.mrb[0].mxu0
  %400 = vmatprep.mubr.f32.mxu0 0.0
  %401 = vmatmul.mubr.f32.gmra.mrb[0].mxu0 %v323
  %v402 = vpop.f32.mrb[0].mxu0
  %v403 = vadd.f32 %v317, %v402
  %v404 = vpop.f32.mrb[0].mxu0
  %405 = vmatprep.mubr.f32.mxu0 0.0
  %406 = vmatmul.mubr.f32.gmra.mrb[0].mxu0 %v326
  %v407 = vpop.f32.mrb[0].mxu0
  %v408 = vadd.f32 %v317, %v407
  %v409 = vpop.f32.mrb[0].mxu0
  %410 = vmatprep.mubr.f32.mxu0 0.0
  %411 = vmatmul.mubr.f32.gmra.mrb[0].mxu0 %v329
  %v412 = vpop.f32.mrb[0].mxu0
  %v413 = vadd.f32 %v317, %v412
  %v414 = vpop.f32.mrb[0].mxu0
  %415 = vdwg.mxu0
  %vm416 = vcmask 64512
  %v417 = vsel %vm416, %v398, -inf
  %418 = vmax.xlane.f32.xlu0 %v417
  %v419 = vpop.xlane.xlu0 %418
  %v420 = vsel %vm416, %v403, -inf
  %421 = vmax.xlane.f32.xlu0 %v420
  %v422 = vpop.xlane.xlu0 %421
  %v423 = vsel %vm416, %v408, -inf
  %424 = vmax.xlane.f32.xlu0 %v423
  %v425 = vpop.xlane.xlu0 %424
  %v426 = vsel %vm416, %v413, -inf
  %427 = vmax.xlane.f32.xlu0 %v426
  %v428 = vpop.xlane.xlu0 %427
  %v429 = vsub.f32 %v398, %v419
  %v430 = vsub.f32 %v403, %v422
  %v431 = vsub.f32 %v408, %v425
  %v432 = vsub.f32 %v413, %v428
  %v433 = vmul.f32 %v429, 1.442695
  %v434 = vpow.pop %v433
  %v435 = vmul.f32 %v430, 1.442695
  %v436 = vpow.pop %v435
  %v437 = vmul.f32 %v431, 1.442695
  %v438 = vpow.pop %v437
  %v439 = vmul.f32 %v432, 1.442695
  %v440 = vpow.pop %v439
  %v441 = vsel %vm416, %v434, 0.0
  %442 = vadd.xlane.f32.xlu0 %v441
  %v443 = vpop.xlane.xlu0 %442
  %v444 = vsel %vm416, %v436, 0.0
  %445 = vadd.xlane.f32.xlu0 %v444
  %v446 = vpop.xlane.xlu0 %445
  %v447 = vsel %vm416, %v438, 0.0
  %448 = vadd.xlane.f32.xlu0 %v447
  %v449 = vpop.xlane.xlu0 %448
  %v450 = vsel %vm416, %v440, 0.0
  %451 = vadd.xlane.f32.xlu0 %v450
  %v452 = vpop.xlane.xlu0 %451
  %v453 = vlog2.pop %v443
  %v454 = vmul.f32 %v453, 0.6931472
  %v455 = vlog2.pop %v446
  %v456 = vmul.f32 %v455, 0.6931472
  %v457 = vlog2.pop %v449
  %v458 = vmul.f32 %v457, 0.6931472
  %v459 = vlog2.pop %v452
  %v460 = vmul.f32 %v459, 0.6931472
  %v461 = vsub.f32 %v429, %v454
  %v462 = vsub.f32 %v430, %v456
  %v463 = vsub.f32 %v431, %v458
  %v464 = vsub.f32 %v432, %v460
  %v465 = vsel %vm416, %v461, 0.0
  %v466 = vsel %vm416, %v462, 0.0
  %v467 = vsel %vm416, %v463, 0.0
  %v468 = vsel %vm416, %v464, 0.0
  %469 = vst [vmem:[%s5] sm:$0xff] %v465
  %470 = vst [vmem:[%s5 + $0x8] sm:$0xff] %v466
  %471 = vst [vmem:[%s5 + $0x10] sm:$0xff] %v467
  %472 = vst [vmem:[%s5 + $0x18] sm:$0xff] %v468
  // Predicated region
  $region22: #{gat_forward.3} parent=0 // pred_check
    _
  $region23: #{gat_forward.3} parent=0 // pred_check_branch
    %474 = sbr.rel (0) target = $region25
  $region24: #{gat_forward.3} parent=0 // pred_region
    _
  $region25: #{gat_forward.3} parent=0 // pred_fallthru
    _
  // Predicated region
  $region26: #{gat_forward.3} parent=0 // pred_check
    _
  $region27: #{gat_forward.3} parent=0 // pred_check_branch
    %476 = sbr.rel (0) target = $region29
  $region28: #{gat_forward.3} parent=0 // pred_region
    _
  $region29: #{gat_forward.3} parent=0 // pred_fallthru
    _

// kernel: gat_forward.2
$region0: #{gat_forward.2}
  #allocation0 [shape = 'u32[]', space=smem, size = 0x4, offset = 0x4, fixed_abs, tag = 'smem constant byte address 0x4 - core index']
  #allocation1 [shape = 'u32[144,128]{1,0:T(1,128)}', space=vmem, size = 0x12000, scoped, tag = 'internal scratch']
  %s0 = inlined_call_operand.vmem [shape: f32[32,16], index: 0, kind: input, shape index: {}]
  %s1 = inlined_call_operand.vmem [shape: bf16[32,32], index: 1, kind: input, shape index: {}]
  %s2 = inlined_call_operand.vmem [shape: f32[16,36], index: 2, kind: input, shape index: {}]
  %s3 = inlined_call_operand.vmem [shape: f32[4,16], index: 3, kind: input, shape index: {}]
  %s4 = inlined_call_operand.vmem [shape: f32[1,32], index: 4, kind: input, shape index: {}]
  %s5 = inlined_call_operand.vmem [shape: f32[32,128], index: 5, kind: output, shape index: {}]
  %s6 = sld [smem:[#allocation0]]
  $region30: #{gat_forward.2} parent=0
    _
  %s8 = ssub.s32 1, %s6
  %s9 = scalar_select 0, %s8, %s6
  // Predicated region
  $region2: #{gat_forward.2} parent=0 // pred_check
    _
  $region3: #{gat_forward.2} parent=0 // pred_check_branch
    %11 = sbr.rel (0) target = $region5
  $region4: #{gat_forward.2} parent=0 // pred_region
    _
  $region5: #{gat_forward.2} parent=0 // pred_fallthru
    _
  // Predicated region
  $region6: #{gat_forward.2} parent=0 // pred_check
    _
  $region7: #{gat_forward.2} parent=0 // pred_check_branch
    %13 = sbr.rel (0) target = $region9
  $region8: #{gat_forward.2} parent=0 // pred_region
    _
  $region9: #{gat_forward.2} parent=0 // pred_fallthru
    _
  // Predicated region
  $region10: #{gat_forward.2} parent=0 // pred_check
    _
  $region11: #{gat_forward.2} parent=0 // pred_check_branch
    %15 = sbr.rel (0) target = $region13
  $region12: #{gat_forward.2} parent=0 // pred_region
    _
  $region13: #{gat_forward.2} parent=0 // pred_fallthru
    _
  // Predicated region
  $region14: #{gat_forward.2} parent=0 // pred_check
    _
  $region15: #{gat_forward.2} parent=0 // pred_check_branch
    %17 = sbr.rel (0) target = $region17
  $region16: #{gat_forward.2} parent=0 // pred_region
    _
  $region17: #{gat_forward.2} parent=0 // pred_fallthru
    _
  // Predicated region
  $region18: #{gat_forward.2} parent=0 // pred_check
    _
  $region19: #{gat_forward.2} parent=0 // pred_check_branch
    %19 = sbr.rel (0) target = $region21
  $region20: #{gat_forward.2} parent=0 // pred_region
    _
  $region21: #{gat_forward.2} parent=0 // pred_fallthru
    _
  %v23 = vld [vmem:[%s0] sm:$0xff]
  %v24 = vld [vmem:[%s0 + $0x8] sm:$0xff]
  %v25 = vld [vmem:[%s0 + $0x10] sm:$0xff]
  %v26 = vld [vmem:[%s0 + $0x18] sm:$0xff]
  %v27 = vld [vmem:[%s2] sm:$0xff]
  %v28 = vld [vmem:[%s2 + $0x8] sm:$0xff]
  %vm29 = vcmask 130048
  %v31 = vsel %vm29, %v23, 0
  %v34 = vsel %vm29, %v24, 0
  %v37 = vsel %vm29, %v25, 0
  %v40 = vsel %vm29, %v26, 0
  %42 = vmatprep.subr.mxu0 0.0
  %43 = vmatpush1.msra.mxu0 %v27
  %44 = vmatprep.subr.mxu0 0.0
  %45 = vmatpush1.msra.mxu0 %v28
  %46 = vmatprep.subr.mxu0 0.0
  %47 = vmatpush1.msra.mxu0 0.0
  %48 = vmatprep.subr.mxu0 0.0
  %49 = vmatpush1.msra.mxu0 0.0
  %50 = vmatprep.subr.mxu0 0.0
  %51 = vmatpush1.msra.mxu0 0.0
  %52 = vmatprep.subr.mxu0 0.0
  %53 = vmatpush1.msra.mxu0 0.0
  %54 = vmatprep.subr.mxu0 0.0
  %55 = vmatpush1.msra.mxu0 0.0
  %56 = vmatprep.subr.mxu0 0.0
  %57 = vmatpush1.msra.mxu0 0.0
  %58 = vmatprep.subr.mxu0 0.0
  %59 = vmatpush1.msra.mxu0 0.0
  %60 = vmatprep.subr.mxu0 0.0
  %61 = vmatpush1.msra.mxu0 0.0
  %62 = vmatprep.subr.mxu0 0.0
  %63 = vmatpush1.msra.mxu0 0.0
  %64 = vmatprep.subr.mxu0 0.0
  %65 = vmatpush1.msra.mxu0 0.0
  %66 = vmatprep.subr.mxu0 0.0
  %67 = vmatpush1.msra.mxu0 0.0
  %68 = vmatprep.subr.mxu0 0.0
  %69 = vmatpush1.msra.mxu0 0.0
  %70 = vmatprep.subr.mxu0 0.0
  %71 = vmatpush1.msra.mxu0 0.0
  %72 = vmatprep.subr.mxu0 0.0
  %73 = vmatpush1.msra.mxu0 0.0
  %74 = vmatprep.subr.mxu0 0.0
  %75 = vmatpush1.msra.mxu0 0.0
  %76 = vmatprep.subr.mxu0 0.0
  %77 = vmatpush1.msra.mxu0 0.0
  %78 = vmatprep.subr.mxu0 0.0
  %79 = vmatpush1.msra.mxu0 0.0
  %80 = vmatprep.subr.mxu0 0.0
  %81 = vmatpush1.msra.mxu0 0.0
  %82 = vmatprep.subr.mxu0 0.0
  %83 = vmatpush1.msra.mxu0 0.0
  %84 = vmatprep.subr.mxu0 0.0
  %85 = vmatpush1.msra.mxu0 0.0
  %86 = vmatprep.subr.mxu0 0.0
  %87 = vmatpush1.msra.mxu0 0.0
  %88 = vmatprep.subr.mxu0 0.0
  %89 = vmatpush1.msra.mxu0 0.0
  %90 = vmatprep.subr.mxu0 0.0
  %91 = vmatpush1.msra.mxu0 0.0
  %92 = vmatprep.subr.mxu0 0.0
  %93 = vmatpush1.msra.mxu0 0.0
  %94 = vmatprep.subr.mxu0 0.0
  %95 = vmatpush1.msra.mxu0 0.0
  %96 = vmatprep.subr.mxu0 0.0
  %97 = vmatpush1.msra.mxu0 0.0
  %98 = vmatprep.subr.mxu0 0.0
  %99 = vmatpush1.msra.mxu0 0.0
  %100 = vmatprep.subr.mxu0 0.0
  %101 = vmatpush1.msra.mxu0 0.0
  %102 = vmatprep.subr.mxu0 0.0
  %103 = vmatpush1.msra.mxu0 0.0
  %104 = vmatprep.subr.mxu0 0.0
  %105 = vmatpush1.msra.mxu0 0.0
  %106 = vmatprep.mubr.f32.mxu0 0.0
  %107 = vmatmul.mubr.f32.gmra.mrb[0].mxu0 %v31
  %v108 = vpop.f32.mrb[0].mxu0
  %v109 = vadd.f32 0.0, %v108
  %v110 = vpop.f32.mrb[0].mxu0
  %111 = vmatprep.mubr.f32.mxu0 0.0
  %112 = vmatmul.mubr.f32.gmra.mrb[0].mxu0 %v34
  %v113 = vpop.f32.mrb[0].mxu0
  %v114 = vadd.f32 0.0, %v113
  %v115 = vpop.f32.mrb[0].mxu0
  %116 = vmatprep.mubr.f32.mxu0 0.0
  %117 = vmatmul.mubr.f32.gmra.mrb[0].mxu0 %v37
  %v118 = vpop.f32.mrb[0].mxu0
  %v119 = vadd.f32 0.0, %v118
  %v120 = vpop.f32.mrb[0].mxu0
  %121 = vmatprep.mubr.f32.mxu0 0.0
  %122 = vmatmul.mubr.f32.gmra.mrb[0].mxu0 %v40
  %v123 = vpop.f32.mrb[0].mxu0
  %v124 = vadd.f32 0.0, %v123
  %v125 = vpop.f32.mrb[0].mxu0
  %126 = vdwg.mxu0
  %v127 = vld [vmem:[%s3] sm:$0xf]
  %v129 = vsel %vm29, %v127, 0
  %131 = vmatprep.subr.mxu0 0.0
  %132 = vmatpush1.xpose.msra.mxu0 %v31
  %133 = vmatprep.subr.mxu0 0.0
  %134 = vmatpush1.xpose.msra.mxu0 %v34
  %135 = vmatprep.subr.mxu0 0.0
  %136 = vmatpush1.xpose.msra.mxu0 %v37
  %137 = vmatprep.subr.mxu0 0.0
  %138 = vmatpush1.xpose.msra.mxu0 %v40
  %139 = vmatprep.subr.mxu0 0.0
  %140 = vmatpush1.xpose.msra.mxu0 0.0
  %141 = vmatprep.subr.mxu0 0.0
  %142 = vmatpush1.xpose.msra.mxu0 0.0
  %143 = vmatprep.subr.mxu0 0.0
  %144 = vmatpush1.xpose.msra.mxu0 0.0
  %145 = vmatprep.subr.mxu0 0.0
  %146 = vmatpush1.xpose.msra.mxu0 0.0
  %147 = vmatprep.subr.mxu0 0.0
  %148 = vmatpush1.xpose.msra.mxu0 0.0
  %149 = vmatprep.subr.mxu0 0.0
  %150 = vmatpush1.xpose.msra.mxu0 0.0
  %151 = vmatprep.subr.mxu0 0.0
  %152 = vmatpush1.xpose.msra.mxu0 0.0
  %153 = vmatprep.subr.mxu0 0.0
  %154 = vmatpush1.xpose.msra.mxu0 0.0
  %155 = vmatprep.subr.mxu0 0.0
  %156 = vmatpush1.xpose.msra.mxu0 0.0
  %157 = vmatprep.subr.mxu0 0.0
  %158 = vmatpush1.xpose.msra.mxu0 0.0
  %159 = vmatprep.subr.mxu0 0.0
  %160 = vmatpush1.xpose.msra.mxu0 0.0
  %161 = vmatprep.subr.mxu0 0.0
  %162 = vmatpush1.xpose.msra.mxu0 0.0
  %163 = vmatprep.subr.mxu0 0.0
  %164 = vmatpush1.xpose.msra.mxu0 0.0
  %165 = vmatprep.subr.mxu0 0.0
  %166 = vmatpush1.xpose.msra.mxu0 0.0
  %167 = vmatprep.subr.mxu0 0.0
  %168 = vmatpush1.xpose.msra.mxu0 0.0
  %169 = vmatprep.subr.mxu0 0.0
  %170 = vmatpush1.xpose.msra.mxu0 0.0
  %171 = vmatprep.subr.mxu0 0.0
  %172 = vmatpush1.xpose.msra.mxu0 0.0
  %173 = vmatprep.subr.mxu0 0.0
  %174 = vmatpush1.xpose.msra.mxu0 0.0
  %175 = vmatprep.subr.mxu0 0.0
  %176 = vmatpush1.xpose.msra.mxu0 0.0
  %177 = vmatprep.subr.mxu0 0.0
  %178 = vmatpush1.xpose.msra.mxu0 0.0
  %179 = vmatprep.subr.mxu0 0.0
  %180 = vmatpush1.xpose.msra.mxu0 0.0
  %181 = vmatprep.subr.mxu0 0.0
  %182 = vmatpush1.xpose.msra.mxu0 0.0
  %183 = vmatprep.subr.mxu0 0.0
  %184 = vmatpush1.xpose.msra.mxu0 0.0
  %185 = vmatprep.subr.mxu0 0.0
  %186 = vmatpush1.xpose.msra.mxu0 0.0
  %187 = vmatprep.subr.mxu0 0.0
  %188 = vmatpush1.xpose.msra.mxu0 0.0
  %189 = vmatprep.subr.mxu0 0.0
  %190 = vmatpush1.xpose.msra.mxu0 0.0
  %191 = vmatprep.subr.mxu0 0.0
  %192 = vmatpush1.xpose.msra.mxu0 0.0
  %193 = vmatprep.subr.mxu0 0.0
  %194 = vmatpush1.xpose.msra.mxu0 0.0
  %195 = vmatprep.mubr.f32.mxu0 0.0
  %196 = vmatmul.mubr.f32.gmra.mrb[0].mxu0 %v129
  %v197 = vpop.f32.mrb[0].mxu0
  %v198 = vadd.f32 0.0, %v197
  %v199 = vpop.f32.mrb[0].mxu0
  %200 = vdwg.mxu0
  %v201 = vld [vmem:[%s1] sm:$0xf]
  %v202 = vld [vmem:[%s1 + $0x4] sm:$0xf]
  %v203 = vld [vmem:[%s1 + $0x8] sm:$0xf]
  %v204 = vld [vmem:[%s1 + $0xc] sm:$0xf]
  %vm205 = vcmp.gt.bf16.partialorder %v201, 0
  %vm206 = vcmp.gt.bf16.partialorder %v202, 0
  %vm207 = vcmp.gt.bf16.partialorder %v203, 0
  %vm208 = vcmp.gt.bf16.partialorder %v204, 0
  %210 = vset.pattern.permute.xlu0 32
  %211 = vperm.xlu0 %210, %v109
  %v212 = vpop.permute.xlu0 %211
  %215 = vset.pattern.permute.xlu0 32
  %216 = vperm.xlu0 %215, %v114
  %v217 = vpop.permute.xlu0 %216
  %220 = vset.pattern.permute.xlu0 32
  %221 = vperm.xlu0 %220, %v119
  %v222 = vpop.permute.xlu0 %221
  %225 = vset.pattern.permute.xlu0 32
  %226 = vperm.xlu0 %225, %v124
  %v227 = vpop.permute.xlu0 %226
  %v229 = vlaneseq
  %v230 = vshrl.u32 %v229, 7
  %v231 = vsub.s32 0, %v230
  %v232 = vrot.slane %v198, %v231
  %v233 = vadd.f32 %v212, %v232
  %v234 = vadd.f32 %v217, %v232
  %v235 = vadd.f32 %v222, %v232
  %v236 = vadd.f32 %v227, %v232
  %vm237 = vcmp.gt.f32.partialorder %v233, 0.0
  %vm238 = vcmp.gt.f32.partialorder %v234, 0.0
  %vm239 = vcmp.gt.f32.partialorder %v235, 0.0
  %vm240 = vcmp.gt.f32.partialorder %v236, 0.0
  %v241 = vmul.f32 %v233, 0.2
  %v242 = vmul.f32 %v234, 0.2
  %v243 = vmul.f32 %v235, 0.2
  %v244 = vmul.f32 %v236, 0.2
  %v245 = vsel %vm237, %v233, %v241
  %v246 = vsel %vm238, %v234, %v242
  %v247 = vsel %vm239, %v235, %v243
  %v248 = vsel %vm240, %v236, %v244
  %v249 = vsel %vm205, 65537, 0
  %v250 = vsel %vm206, 65537, 0
  %v251 = vsel %vm207, 65537, 0
  %v252 = vsel %vm208, 65537, 0
  %v253 = vunpack.c.l.b16 %v249
  %v254 = vunpack.c.l.b16 %v250
  %v255 = vunpack.c.l.b16 %v251
  %v256 = vunpack.c.l.b16 %v252
  %vm257 = vcmp.ne.s32.totalorder %v253, 0
  %vm258 = vcmp.ne.s32.totalorder %v254, 0
  %vm259 = vcmp.ne.s32.totalorder %v255, 0
  %vm260 = vcmp.ne.s32.totalorder %v256, 0
  %v261 = vsel %vm257, %v245, -1e+30
  %v262 = vsel %vm258, %v246, -1e+30
  %v263 = vsel %vm259, %v247, -1e+30
  %v264 = vsel %vm260, %v248, -1e+30
  %vm265 = vcmask 261120
  %v266 = vsel %vm265, %v261, -inf
  %267 = vmax.xlane.f32.xlu0 %v266
  %v268 = vpop.xlane.xlu0 %267
  %v269 = vsel %vm265, %v262, -inf
  %270 = vmax.xlane.f32.xlu0 %v269
  %v271 = vpop.xlane.xlu0 %270
  %v272 = vsel %vm265, %v263, -inf
  %273 = vmax.xlane.f32.xlu0 %v272
  %v274 = vpop.xlane.xlu0 %273
  %v275 = vsel %vm265, %v264, -inf
  %276 = vmax.xlane.f32.xlu0 %v275
  %v277 = vpop.xlane.xlu0 %276
  %v278 = vsub.f32 %v261, %v268
  %v279 = vsub.f32 %v262, %v271
  %v280 = vsub.f32 %v263, %v274
  %v281 = vsub.f32 %v264, %v277
  %v282 = vmul.f32 %v278, 1.442695
  %v283 = vpow.pop %v282
  %v284 = vmul.f32 %v279, 1.442695
  %v285 = vpow.pop %v284
  %v286 = vmul.f32 %v280, 1.442695
  %v287 = vpow.pop %v286
  %v288 = vmul.f32 %v281, 1.442695
  %v289 = vpow.pop %v288
  %v290 = vsel %vm265, %v283, 0.0
  %291 = vadd.xlane.f32.xlu0 %v290
  %v292 = vpop.xlane.xlu0 %291
  %v293 = vsel %vm265, %v285, 0.0
  %294 = vadd.xlane.f32.xlu0 %v293
  %v295 = vpop.xlane.xlu0 %294
  %v296 = vsel %vm265, %v287, 0.0
  %297 = vadd.xlane.f32.xlu0 %v296
  %v298 = vpop.xlane.xlu0 %297
  %v299 = vsel %vm265, %v289, 0.0
  %300 = vadd.xlane.f32.xlu0 %v299
  %v301 = vpop.xlane.xlu0 %300
  %v302 = vrcp.pop %v292
  %v303 = vrcp.pop %v295
  %v304 = vrcp.pop %v298
  %v305 = vrcp.pop %v301
  %v306 = vmul.f32 %v283, %v302
  %v307 = vmul.f32 %v285, %v303
  %v308 = vmul.f32 %v287, %v304
  %v309 = vmul.f32 %v289, %v305
  %v311 = vsel %vm265, %v306, 0
  %v314 = vsel %vm265, %v307, 0
  %v317 = vsel %vm265, %v308, 0
  %v320 = vsel %vm265, %v309, 0
  %322 = vmatprep.subr.mxu0 0.0
  %323 = vmatpush1.msra.mxu0 %v109
  %324 = vmatprep.subr.mxu0 0.0
  %325 = vmatpush1.msra.mxu0 %v114
  %326 = vmatprep.subr.mxu0 0.0
  %327 = vmatpush1.msra.mxu0 %v119
  %328 = vmatprep.subr.mxu0 0.0
  %329 = vmatpush1.msra.mxu0 %v124
  %330 = vmatprep.subr.mxu0 0.0
  %331 = vmatpush1.msra.mxu0 0.0
  %332 = vmatprep.subr.mxu0 0.0
  %333 = vmatpush1.msra.mxu0 0.0
  %334 = vmatprep.subr.mxu0 0.0
  %335 = vmatpush1.msra.mxu0 0.0
  %336 = vmatprep.subr.mxu0 0.0
  %337 = vmatpush1.msra.mxu0 0.0
  %338 = vmatprep.subr.mxu0 0.0
  %339 = vmatpush1.msra.mxu0 0.0
  %340 = vmatprep.subr.mxu0 0.0
  %341 = vmatpush1.msra.mxu0 0.0
  %342 = vmatprep.subr.mxu0 0.0
  %343 = vmatpush1.msra.mxu0 0.0
  %344 = vmatprep.subr.mxu0 0.0
  %345 = vmatpush1.msra.mxu0 0.0
  %346 = vmatprep.subr.mxu0 0.0
  %347 = vmatpush1.msra.mxu0 0.0
  %348 = vmatprep.subr.mxu0 0.0
  %349 = vmatpush1.msra.mxu0 0.0
  %350 = vmatprep.subr.mxu0 0.0
  %351 = vmatpush1.msra.mxu0 0.0
  %352 = vmatprep.subr.mxu0 0.0
  %353 = vmatpush1.msra.mxu0 0.0
  %354 = vmatprep.subr.mxu0 0.0
  %355 = vmatpush1.msra.mxu0 0.0
  %356 = vmatprep.subr.mxu0 0.0
  %357 = vmatpush1.msra.mxu0 0.0
  %358 = vmatprep.subr.mxu0 0.0
  %359 = vmatpush1.msra.mxu0 0.0
  %360 = vmatprep.subr.mxu0 0.0
  %361 = vmatpush1.msra.mxu0 0.0
  %362 = vmatprep.subr.mxu0 0.0
  %363 = vmatpush1.msra.mxu0 0.0
  %364 = vmatprep.subr.mxu0 0.0
  %365 = vmatpush1.msra.mxu0 0.0
  %366 = vmatprep.subr.mxu0 0.0
  %367 = vmatpush1.msra.mxu0 0.0
  %368 = vmatprep.subr.mxu0 0.0
  %369 = vmatpush1.msra.mxu0 0.0
  %370 = vmatprep.subr.mxu0 0.0
  %371 = vmatpush1.msra.mxu0 0.0
  %372 = vmatprep.subr.mxu0 0.0
  %373 = vmatpush1.msra.mxu0 0.0
  %374 = vmatprep.subr.mxu0 0.0
  %375 = vmatpush1.msra.mxu0 0.0
  %376 = vmatprep.subr.mxu0 0.0
  %377 = vmatpush1.msra.mxu0 0.0
  %378 = vmatprep.subr.mxu0 0.0
  %379 = vmatpush1.msra.mxu0 0.0
  %380 = vmatprep.subr.mxu0 0.0
  %381 = vmatpush1.msra.mxu0 0.0
  %382 = vmatprep.subr.mxu0 0.0
  %383 = vmatpush1.msra.mxu0 0.0
  %384 = vmatprep.subr.mxu0 0.0
  %385 = vmatpush1.msra.mxu0 0.0
  %386 = vmatprep.mubr.f32.mxu0 0.0
  %387 = vmatmul.mubr.f32.gmra.mrb[0].mxu0 %v311
  %v388 = vpop.f32.mrb[0].mxu0
  %v389 = vadd.f32 0.0, %v388
  %v390 = vpop.f32.mrb[0].mxu0
  %391 = vmatprep.mubr.f32.mxu0 0.0
  %392 = vmatmul.mubr.f32.gmra.mrb[0].mxu0 %v314
  %v393 = vpop.f32.mrb[0].mxu0
  %v394 = vadd.f32 0.0, %v393
  %v395 = vpop.f32.mrb[0].mxu0
  %396 = vmatprep.mubr.f32.mxu0 0.0
  %397 = vmatmul.mubr.f32.gmra.mrb[0].mxu0 %v317
  %v398 = vpop.f32.mrb[0].mxu0
  %v399 = vadd.f32 0.0, %v398
  %v400 = vpop.f32.mrb[0].mxu0
  %401 = vmatprep.mubr.f32.mxu0 0.0
  %402 = vmatmul.mubr.f32.gmra.mrb[0].mxu0 %v320
  %v403 = vpop.f32.mrb[0].mxu0
  %v404 = vadd.f32 0.0, %v403
  %v405 = vpop.f32.mrb[0].mxu0
  %406 = vdwg.mxu0
  %407 = vset.pattern.permute.xlu0 33
  %408 = vperm.xlu0 %407, %v109
  %v409 = vpop.permute.xlu0 %408
  %411 = vset.pattern.permute.xlu0 33
  %412 = vperm.xlu0 %411, %v114
  %v413 = vpop.permute.xlu0 %412
  %415 = vset.pattern.permute.xlu0 33
  %416 = vperm.xlu0 %415, %v119
  %v417 = vpop.permute.xlu0 %416
  %419 = vset.pattern.permute.xlu0 33
  %420 = vperm.xlu0 %419, %v124
  %v421 = vpop.permute.xlu0 %420
  %v423 = vlaneseq
  %v424 = vshrl.u32 %v423, 7
  %v425 = vsub.s32 1, %v424
  %v426 = vrot.slane %v198, %v425
  %v427 = vadd.f32 %v409, %v426
  %v428 = vadd.f32 %v413, %v426
  %v429 = vadd.f32 %v417, %v426
  %v430 = vadd.f32 %v421, %v426
  %vm431 = vcmp.gt.f32.partialorder %v427, 0.0
  %vm432 = vcmp.gt.f32.partialorder %v428, 0.0
  %vm433 = vcmp.gt.f32.partialorder %v429, 0.0
  %vm434 = vcmp.gt.f32.partialorder %v430, 0.0
  %v435 = vmul.f32 %v427, 0.2
  %v436 = vmul.f32 %v428, 0.2
  %v437 = vmul.f32 %v429, 0.2
  %v438 = vmul.f32 %v430, 0.2
  %v439 = vsel %vm431, %v427, %v435
  %v440 = vsel %vm432, %v428, %v436
  %v441 = vsel %vm433, %v429, %v437
  %v442 = vsel %vm434, %v430, %v438
  %v443 = vsel %vm257, %v439, -1e+30
  %v444 = vsel %vm258, %v440, -1e+30
  %v445 = vsel %vm259, %v441, -1e+30
  %v446 = vsel %vm260, %v442, -1e+30
  %v447 = vsel %vm265, %v443, -inf
  %448 = vmax.xlane.f32.xlu0 %v447
  %v449 = vpop.xlane.xlu0 %448
  %v450 = vsel %vm265, %v444, -inf
  %451 = vmax.xlane.f32.xlu0 %v450
  %v452 = vpop.xlane.xlu0 %451
  %v453 = vsel %vm265, %v445, -inf
  %454 = vmax.xlane.f32.xlu0 %v453
  %v455 = vpop.xlane.xlu0 %454
  %v456 = vsel %vm265, %v446, -inf
  %457 = vmax.xlane.f32.xlu0 %v456
  %v458 = vpop.xlane.xlu0 %457
  %v459 = vsub.f32 %v443, %v449
  %v460 = vsub.f32 %v444, %v452
  %v461 = vsub.f32 %v445, %v455
  %v462 = vsub.f32 %v446, %v458
  %v463 = vmul.f32 %v459, 1.442695
  %v464 = vpow.pop %v463
  %v465 = vmul.f32 %v460, 1.442695
  %v466 = vpow.pop %v465
  %v467 = vmul.f32 %v461, 1.442695
  %v468 = vpow.pop %v467
  %v469 = vmul.f32 %v462, 1.442695
  %v470 = vpow.pop %v469
  %v471 = vsel %vm265, %v464, 0.0
  %472 = vadd.xlane.f32.xlu0 %v471
  %v473 = vpop.xlane.xlu0 %472
  %v474 = vsel %vm265, %v466, 0.0
  %475 = vadd.xlane.f32.xlu0 %v474
  %v476 = vpop.xlane.xlu0 %475
  %v477 = vsel %vm265, %v468, 0.0
  %478 = vadd.xlane.f32.xlu0 %v477
  %v479 = vpop.xlane.xlu0 %478
  %v480 = vsel %vm265, %v470, 0.0
  %481 = vadd.xlane.f32.xlu0 %v480
  %v482 = vpop.xlane.xlu0 %481
  %v483 = vrcp.pop %v473
  %v484 = vrcp.pop %v476
  %v485 = vrcp.pop %v479
  %v486 = vrcp.pop %v482
  %v487 = vmul.f32 %v464, %v483
  %v488 = vmul.f32 %v466, %v484
  %v489 = vmul.f32 %v468, %v485
  %v490 = vmul.f32 %v470, %v486
  %491 = vrot.lane.b32.xlu0 %v109, 120
  %v492 = vpop.permute.xlu0 %491
  %493 = vrot.lane.b32.xlu0 %v114, 120
  %v494 = vpop.permute.xlu0 %493
  %495 = vrot.lane.b32.xlu0 %v119, 120
  %v496 = vpop.permute.xlu0 %495
  %497 = vrot.lane.b32.xlu0 %v124, 120
  %v498 = vpop.permute.xlu0 %497
  %v504 = vsel %vm265, %v487, 0
  %v507 = vsel %vm265, %v488, 0
  %v510 = vsel %vm265, %v489, 0
  %v513 = vsel %vm265, %v490, 0
  %515 = vmatprep.subr.mxu0 0.0
  %516 = vmatpush1.msra.mxu0 %v492
  %517 = vmatprep.subr.mxu0 0.0
  %518 = vmatpush1.msra.mxu0 %v494
  %519 = vmatprep.subr.mxu0 0.0
  %520 = vmatpush1.msra.mxu0 %v496
  %521 = vmatprep.subr.mxu0 0.0
  %522 = vmatpush1.msra.mxu0 %v498
  %523 = vmatprep.subr.mxu0 0.0
  %524 = vmatpush1.msra.mxu0 0.0
  %525 = vmatprep.subr.mxu0 0.0
  %526 = vmatpush1.msra.mxu0 0.0
  %527 = vmatprep.subr.mxu0 0.0
  %528 = vmatpush1.msra.mxu0 0.0
  %529 = vmatprep.subr.mxu0 0.0
  %530 = vmatpush1.msra.mxu0 0.0
  %531 = vmatprep.subr.mxu0 0.0
  %532 = vmatpush1.msra.mxu0 0.0
  %533 = vmatprep.subr.mxu0 0.0
  %534 = vmatpush1.msra.mxu0 0.0
  %535 = vmatprep.subr.mxu0 0.0
  %536 = vmatpush1.msra.mxu0 0.0
  %537 = vmatprep.subr.mxu0 0.0
  %538 = vmatpush1.msra.mxu0 0.0
  %539 = vmatprep.subr.mxu0 0.0
  %540 = vmatpush1.msra.mxu0 0.0
  %541 = vmatprep.subr.mxu0 0.0
  %542 = vmatpush1.msra.mxu0 0.0
  %543 = vmatprep.subr.mxu0 0.0
  %544 = vmatpush1.msra.mxu0 0.0
  %545 = vmatprep.subr.mxu0 0.0
  %546 = vmatpush1.msra.mxu0 0.0
  %547 = vmatprep.subr.mxu0 0.0
  %548 = vmatpush1.msra.mxu0 0.0
  %549 = vmatprep.subr.mxu0 0.0
  %550 = vmatpush1.msra.mxu0 0.0
  %551 = vmatprep.subr.mxu0 0.0
  %552 = vmatpush1.msra.mxu0 0.0
  %553 = vmatprep.subr.mxu0 0.0
  %554 = vmatpush1.msra.mxu0 0.0
  %555 = vmatprep.subr.mxu0 0.0
  %556 = vmatpush1.msra.mxu0 0.0
  %557 = vmatprep.subr.mxu0 0.0
  %558 = vmatpush1.msra.mxu0 0.0
  %559 = vmatprep.subr.mxu0 0.0
  %560 = vmatpush1.msra.mxu0 0.0
  %561 = vmatprep.subr.mxu0 0.0
  %562 = vmatpush1.msra.mxu0 0.0
  %563 = vmatprep.subr.mxu0 0.0
  %564 = vmatpush1.msra.mxu0 0.0
  %565 = vmatprep.subr.mxu0 0.0
  %566 = vmatpush1.msra.mxu0 0.0
  %567 = vmatprep.subr.mxu0 0.0
  %568 = vmatpush1.msra.mxu0 0.0
  %569 = vmatprep.subr.mxu0 0.0
  %570 = vmatpush1.msra.mxu0 0.0
  %571 = vmatprep.subr.mxu0 0.0
  %572 = vmatpush1.msra.mxu0 0.0
  %573 = vmatprep.subr.mxu0 0.0
  %574 = vmatpush1.msra.mxu0 0.0
  %575 = vmatprep.subr.mxu0 0.0
  %576 = vmatpush1.msra.mxu0 0.0
  %577 = vmatprep.subr.mxu0 0.0
  %578 = vmatpush1.msra.mxu0 0.0
  %579 = vmatprep.mubr.f32.mxu0 0.0
  %580 = vmatmul.mubr.f32.gmra.mrb[0].mxu0 %v504
  %v581 = vpop.f32.mrb[0].mxu0
  %v582 = vadd.f32 0.0, %v581
  %v583 = vpop.f32.mrb[0].mxu0
  %584 = vmatprep.mubr.f32.mxu0 0.0
  %585 = vmatmul.mubr.f32.gmra.mrb[0].mxu0 %v507
  %v586 = vpop.f32.mrb[0].mxu0
  %v587 = vadd.f32 0.0, %v586
  %v588 = vpop.f32.mrb[0].mxu0
  %589 = vmatprep.mubr.f32.mxu0 0.0
  %590 = vmatmul.mubr.f32.gmra.mrb[0].mxu0 %v510
  %v591 = vpop.f32.mrb[0].mxu0
  %v592 = vadd.f32 0.0, %v591
  %v593 = vpop.f32.mrb[0].mxu0
  %594 = vmatprep.mubr.f32.mxu0 0.0
  %595 = vmatmul.mubr.f32.gmra.mrb[0].mxu0 %v513
  %v596 = vpop.f32.mrb[0].mxu0
  %v597 = vadd.f32 0.0, %v596
  %v598 = vpop.f32.mrb[0].mxu0
  %599 = vdwg.mxu0
  %600 = vset.pattern.permute.xlu0 34
  %601 = vperm.xlu0 %600, %v109
  %v602 = vpop.permute.xlu0 %601
  %604 = vset.pattern.permute.xlu0 34
  %605 = vperm.xlu0 %604, %v114
  %v606 = vpop.permute.xlu0 %605
  %608 = vset.pattern.permute.xlu0 34
  %609 = vperm.xlu0 %608, %v119
  %v610 = vpop.permute.xlu0 %609
  %612 = vset.pattern.permute.xlu0 34
  %613 = vperm.xlu0 %612, %v124
  %v614 = vpop.permute.xlu0 %613
  %v616 = vlaneseq
  %v617 = vshrl.u32 %v616, 7
  %v618 = vsub.s32 2, %v617
  %v619 = vrot.slane %v198, %v618
  %v620 = vadd.f32 %v602, %v619
  %v621 = vadd.f32 %v606, %v619
  %v622 = vadd.f32 %v610, %v619
  %v623 = vadd.f32 %v614, %v619
  %vm624 = vcmp.gt.f32.partialorder %v620, 0.0
  %vm625 = vcmp.gt.f32.partialorder %v621, 0.0
  %vm626 = vcmp.gt.f32.partialorder %v622, 0.0
  %vm627 = vcmp.gt.f32.partialorder %v623, 0.0
  %v628 = vmul.f32 %v620, 0.2
  %v629 = vmul.f32 %v621, 0.2
  %v630 = vmul.f32 %v622, 0.2
  %v631 = vmul.f32 %v623, 0.2
  %v632 = vsel %vm624, %v620, %v628
  %v633 = vsel %vm625, %v621, %v629
  %v634 = vsel %vm626, %v622, %v630
  %v635 = vsel %vm627, %v623, %v631
  %v636 = vsel %vm257, %v632, -1e+30
  %v637 = vsel %vm258, %v633, -1e+30
  %v638 = vsel %vm259, %v634, -1e+30
  %v639 = vsel %vm260, %v635, -1e+30
  %v640 = vsel %vm265, %v636, -inf
  %641 = vmax.xlane.f32.xlu0 %v640
  %v642 = vpop.xlane.xlu0 %641
  %v643 = vsel %vm265, %v637, -inf
  %644 = vmax.xlane.f32.xlu0 %v643
  %v645 = vpop.xlane.xlu0 %644
  %v646 = vsel %vm265, %v638, -inf
  %647 = vmax.xlane.f32.xlu0 %v646
  %v648 = vpop.xlane.xlu0 %647
  %v649 = vsel %vm265, %v639, -inf
  %650 = vmax.xlane.f32.xlu0 %v649
  %v651 = vpop.xlane.xlu0 %650
  %v652 = vsub.f32 %v636, %v642
  %v653 = vsub.f32 %v637, %v645
  %v654 = vsub.f32 %v638, %v648
  %v655 = vsub.f32 %v639, %v651
  %v656 = vmul.f32 %v652, 1.442695
  %v657 = vpow.pop %v656
  %v658 = vmul.f32 %v653, 1.442695
  %v659 = vpow.pop %v658
  %v660 = vmul.f32 %v654, 1.442695
  %v661 = vpow.pop %v660
  %v662 = vmul.f32 %v655, 1.442695
  %v663 = vpow.pop %v662
  %v664 = vsel %vm265, %v657, 0.0
  %665 = vadd.xlane.f32.xlu0 %v664
  %v666 = vpop.xlane.xlu0 %665
  %v667 = vsel %vm265, %v659, 0.0
  %668 = vadd.xlane.f32.xlu0 %v667
  %v669 = vpop.xlane.xlu0 %668
  %v670 = vsel %vm265, %v661, 0.0
  %671 = vadd.xlane.f32.xlu0 %v670
  %v672 = vpop.xlane.xlu0 %671
  %v673 = vsel %vm265, %v663, 0.0
  %674 = vadd.xlane.f32.xlu0 %v673
  %v675 = vpop.xlane.xlu0 %674
  %v676 = vrcp.pop %v666
  %v677 = vrcp.pop %v669
  %v678 = vrcp.pop %v672
  %v679 = vrcp.pop %v675
  %v680 = vmul.f32 %v657, %v676
  %v681 = vmul.f32 %v659, %v677
  %v682 = vmul.f32 %v661, %v678
  %v683 = vmul.f32 %v663, %v679
  %684 = vrot.lane.b32.xlu0 %v109, 112
  %v685 = vpop.permute.xlu0 %684
  %686 = vrot.lane.b32.xlu0 %v114, 112
  %v687 = vpop.permute.xlu0 %686
  %688 = vrot.lane.b32.xlu0 %v119, 112
  %v689 = vpop.permute.xlu0 %688
  %690 = vrot.lane.b32.xlu0 %v124, 112
  %v691 = vpop.permute.xlu0 %690
  %v697 = vsel %vm265, %v680, 0
  %v700 = vsel %vm265, %v681, 0
  %v703 = vsel %vm265, %v682, 0
  %v706 = vsel %vm265, %v683, 0
  %708 = vmatprep.subr.mxu0 0.0
  %709 = vmatpush1.msra.mxu0 %v685
  %710 = vmatprep.subr.mxu0 0.0
  %711 = vmatpush1.msra.mxu0 %v687
  %712 = vmatprep.subr.mxu0 0.0
  %713 = vmatpush1.msra.mxu0 %v689
  %714 = vmatprep.subr.mxu0 0.0
  %715 = vmatpush1.msra.mxu0 %v691
  %716 = vmatprep.subr.mxu0 0.0
  %717 = vmatpush1.msra.mxu0 0.0
  %718 = vmatprep.subr.mxu0 0.0
  %719 = vmatpush1.msra.mxu0 0.0
  %720 = vmatprep.subr.mxu0 0.0
  %721 = vmatpush1.msra.mxu0 0.0
  %722 = vmatprep.subr.mxu0 0.0
  %723 = vmatpush1.msra.mxu0 0.0
  %724 = vmatprep.subr.mxu0 0.0
  %725 = vmatpush1.msra.mxu0 0.0
  %726 = vmatprep.subr.mxu0 0.0
  %727 = vmatpush1.msra.mxu0 0.0
  %728 = vmatprep.subr.mxu0 0.0
  %729 = vmatpush1.msra.mxu0 0.0
  %730 = vmatprep.subr.mxu0 0.0
  %731 = vmatpush1.msra.mxu0 0.0
  %732 = vmatprep.subr.mxu0 0.0
  %733 = vmatpush1.msra.mxu0 0.0
  %734 = vmatprep.subr.mxu0 0.0
  %735 = vmatpush1.msra.mxu0 0.0
  %736 = vmatprep.subr.mxu0 0.0
  %737 = vmatpush1.msra.mxu0 0.0
  %738 = vmatprep.subr.mxu0 0.0
  %739 = vmatpush1.msra.mxu0 0.0
  %740 = vmatprep.subr.mxu0 0.0
  %741 = vmatpush1.msra.mxu0 0.0
  %742 = vmatprep.subr.mxu0 0.0
  %743 = vmatpush1.msra.mxu0 0.0
  %744 = vmatprep.subr.mxu0 0.0
  %745 = vmatpush1.msra.mxu0 0.0
  %746 = vmatprep.subr.mxu0 0.0
  %747 = vmatpush1.msra.mxu0 0.0
  %748 = vmatprep.subr.mxu0 0.0
  %749 = vmatpush1.msra.mxu0 0.0
  %750 = vmatprep.subr.mxu0 0.0
  %751 = vmatpush1.msra.mxu0 0.0
  %752 = vmatprep.subr.mxu0 0.0
  %753 = vmatpush1.msra.mxu0 0.0
  %754 = vmatprep.subr.mxu0 0.0
  %755 = vmatpush1.msra.mxu0 0.0
  %756 = vmatprep.subr.mxu0 0.0
  %757 = vmatpush1.msra.mxu0 0.0
  %758 = vmatprep.subr.mxu0 0.0
  %759 = vmatpush1.msra.mxu0 0.0
  %760 = vmatprep.subr.mxu0 0.0
  %761 = vmatpush1.msra.mxu0 0.0
  %762 = vmatprep.subr.mxu0 0.0
  %763 = vmatpush1.msra.mxu0 0.0
  %764 = vmatprep.subr.mxu0 0.0
  %765 = vmatpush1.msra.mxu0 0.0
  %766 = vmatprep.subr.mxu0 0.0
  %767 = vmatpush1.msra.mxu0 0.0
  %768 = vmatprep.subr.mxu0 0.0
  %769 = vmatpush1.msra.mxu0 0.0
  %770 = vmatprep.subr.mxu0 0.0
  %771 = vmatpush1.msra.mxu0 0.0
  %772 = vmatprep.mubr.f32.mxu0 0.0
  %773 = vmatmul.mubr.f32.gmra.mrb[0].mxu0 %v697
  %v774 = vpop.f32.mrb[0].mxu0
  %v775 = vadd.f32 0.0, %v774
  %v776 = vpop.f32.mrb[0].mxu0
  %777 = vmatprep.mubr.f32.mxu0 0.0
  %778 = vmatmul.mubr.f32.gmra.mrb[0].mxu0 %v700
  %v779 = vpop.f32.mrb[0].mxu0
  %v780 = vadd.f32 0.0, %v779
  %v781 = vpop.f32.mrb[0].mxu0
  %782 = vmatprep.mubr.f32.mxu0 0.0
  %783 = vmatmul.mubr.f32.gmra.mrb[0].mxu0 %v703
  %v784 = vpop.f32.mrb[0].mxu0
  %v785 = vadd.f32 0.0, %v784
  %v786 = vpop.f32.mrb[0].mxu0
  %787 = vmatprep.mubr.f32.mxu0 0.0
  %788 = vmatmul.mubr.f32.gmra.mrb[0].mxu0 %v706
  %v789 = vpop.f32.mrb[0].mxu0
  %v790 = vadd.f32 0.0, %v789
  %v791 = vpop.f32.mrb[0].mxu0
  %792 = vdwg.mxu0
  %793 = vset.pattern.permute.xlu0 35
  %794 = vperm.xlu0 %793, %v109
  %v795 = vpop.permute.xlu0 %794
  %797 = vset.pattern.permute.xlu0 35
  %798 = vperm.xlu0 %797, %v114
  %v799 = vpop.permute.xlu0 %798
  %801 = vset.pattern.permute.xlu0 35
  %802 = vperm.xlu0 %801, %v119
  %v803 = vpop.permute.xlu0 %802
  %805 = vset.pattern.permute.xlu0 35
  %806 = vperm.xlu0 %805, %v124
  %v807 = vpop.permute.xlu0 %806
  %v809 = vlaneseq
  %v810 = vshrl.u32 %v809, 7
  %v811 = vsub.s32 3, %v810
  %v812 = vrot.slane %v198, %v811
  %v813 = vadd.f32 %v795, %v812
  %v814 = vadd.f32 %v799, %v812
  %v815 = vadd.f32 %v803, %v812
  %v816 = vadd.f32 %v807, %v812
  %vm817 = vcmp.gt.f32.partialorder %v813, 0.0
  %vm818 = vcmp.gt.f32.partialorder %v814, 0.0
  %vm819 = vcmp.gt.f32.partialorder %v815, 0.0
  %vm820 = vcmp.gt.f32.partialorder %v816, 0.0
  %v821 = vmul.f32 %v813, 0.2
  %v822 = vmul.f32 %v814, 0.2
  %v823 = vmul.f32 %v815, 0.2
  %v824 = vmul.f32 %v816, 0.2
  %v825 = vsel %vm817, %v813, %v821
  %v826 = vsel %vm818, %v814, %v822
  %v827 = vsel %vm819, %v815, %v823
  %v828 = vsel %vm820, %v816, %v824
  %v829 = vsel %vm257, %v825, -1e+30
  %v830 = vsel %vm258, %v826, -1e+30
  %v831 = vsel %vm259, %v827, -1e+30
  %v832 = vsel %vm260, %v828, -1e+30
  %v833 = vsel %vm265, %v829, -inf
  %834 = vmax.xlane.f32.xlu0 %v833
  %v835 = vpop.xlane.xlu0 %834
  %v836 = vsel %vm265, %v830, -inf
  %837 = vmax.xlane.f32.xlu0 %v836
  %v838 = vpop.xlane.xlu0 %837
  %v839 = vsel %vm265, %v831, -inf
  %840 = vmax.xlane.f32.xlu0 %v839
  %v841 = vpop.xlane.xlu0 %840
  %v842 = vsel %vm265, %v832, -inf
  %843 = vmax.xlane.f32.xlu0 %v842
  %v844 = vpop.xlane.xlu0 %843
  %v845 = vsub.f32 %v829, %v835
  %v846 = vsub.f32 %v830, %v838
  %v847 = vsub.f32 %v831, %v841
  %v848 = vsub.f32 %v832, %v844
  %v849 = vmul.f32 %v845, 1.442695
  %v850 = vpow.pop %v849
  %v851 = vmul.f32 %v846, 1.442695
  %v852 = vpow.pop %v851
  %v853 = vmul.f32 %v847, 1.442695
  %v854 = vpow.pop %v853
  %v855 = vmul.f32 %v848, 1.442695
  %v856 = vpow.pop %v855
  %v857 = vsel %vm265, %v850, 0.0
  %858 = vadd.xlane.f32.xlu0 %v857
  %v859 = vpop.xlane.xlu0 %858
  %v860 = vsel %vm265, %v852, 0.0
  %861 = vadd.xlane.f32.xlu0 %v860
  %v862 = vpop.xlane.xlu0 %861
  %v863 = vsel %vm265, %v854, 0.0
  %864 = vadd.xlane.f32.xlu0 %v863
  %v865 = vpop.xlane.xlu0 %864
  %v866 = vsel %vm265, %v856, 0.0
  %867 = vadd.xlane.f32.xlu0 %v866
  %v868 = vpop.xlane.xlu0 %867
  %v869 = vrcp.pop %v859
  %v870 = vrcp.pop %v862
  %v871 = vrcp.pop %v865
  %v872 = vrcp.pop %v868
  %v873 = vmul.f32 %v850, %v869
  %v874 = vmul.f32 %v852, %v870
  %v875 = vmul.f32 %v854, %v871
  %v876 = vmul.f32 %v856, %v872
  %877 = vrot.lane.b32.xlu0 %v109, 104
  %v878 = vpop.permute.xlu0 %877
  %879 = vrot.lane.b32.xlu0 %v114, 104
  %v880 = vpop.permute.xlu0 %879
  %881 = vrot.lane.b32.xlu0 %v119, 104
  %v882 = vpop.permute.xlu0 %881
  %883 = vrot.lane.b32.xlu0 %v124, 104
  %v884 = vpop.permute.xlu0 %883
  %v890 = vsel %vm265, %v873, 0
  %v893 = vsel %vm265, %v874, 0
  %v896 = vsel %vm265, %v875, 0
  %v899 = vsel %vm265, %v876, 0
  %901 = vmatprep.subr.mxu0 0.0
  %902 = vmatpush1.msra.mxu0 %v878
  %903 = vmatprep.subr.mxu0 0.0
  %904 = vmatpush1.msra.mxu0 %v880
  %905 = vmatprep.subr.mxu0 0.0
  %906 = vmatpush1.msra.mxu0 %v882
  %907 = vmatprep.subr.mxu0 0.0
  %908 = vmatpush1.msra.mxu0 %v884
  %909 = vmatprep.subr.mxu0 0.0
  %910 = vmatpush1.msra.mxu0 0.0
  %911 = vmatprep.subr.mxu0 0.0
  %912 = vmatpush1.msra.mxu0 0.0
  %913 = vmatprep.subr.mxu0 0.0
  %914 = vmatpush1.msra.mxu0 0.0
  %915 = vmatprep.subr.mxu0 0.0
  %916 = vmatpush1.msra.mxu0 0.0
  %917 = vmatprep.subr.mxu0 0.0
  %918 = vmatpush1.msra.mxu0 0.0
  %919 = vmatprep.subr.mxu0 0.0
  %920 = vmatpush1.msra.mxu0 0.0
  %921 = vmatprep.subr.mxu0 0.0
  %922 = vmatpush1.msra.mxu0 0.0
  %923 = vmatprep.subr.mxu0 0.0
  %924 = vmatpush1.msra.mxu0 0.0
  %925 = vmatprep.subr.mxu0 0.0
  %926 = vmatpush1.msra.mxu0 0.0
  %927 = vmatprep.subr.mxu0 0.0
  %928 = vmatpush1.msra.mxu0 0.0
  %929 = vmatprep.subr.mxu0 0.0
  %930 = vmatpush1.msra.mxu0 0.0
  %931 = vmatprep.subr.mxu0 0.0
  %932 = vmatpush1.msra.mxu0 0.0
  %933 = vmatprep.subr.mxu0 0.0
  %934 = vmatpush1.msra.mxu0 0.0
  %935 = vmatprep.subr.mxu0 0.0
  %936 = vmatpush1.msra.mxu0 0.0
  %937 = vmatprep.subr.mxu0 0.0
  %938 = vmatpush1.msra.mxu0 0.0
  %939 = vmatprep.subr.mxu0 0.0
  %940 = vmatpush1.msra.mxu0 0.0
  %941 = vmatprep.subr.mxu0 0.0
  %942 = vmatpush1.msra.mxu0 0.0
  %943 = vmatprep.subr.mxu0 0.0
  %944 = vmatpush1.msra.mxu0 0.0
  %945 = vmatprep.subr.mxu0 0.0
  %946 = vmatpush1.msra.mxu0 0.0
  %947 = vmatprep.subr.mxu0 0.0
  %948 = vmatpush1.msra.mxu0 0.0
  %949 = vmatprep.subr.mxu0 0.0
  %950 = vmatpush1.msra.mxu0 0.0
  %951 = vmatprep.subr.mxu0 0.0
  %952 = vmatpush1.msra.mxu0 0.0
  %953 = vmatprep.subr.mxu0 0.0
  %954 = vmatpush1.msra.mxu0 0.0
  %955 = vmatprep.subr.mxu0 0.0
  %956 = vmatpush1.msra.mxu0 0.0
  %957 = vmatprep.subr.mxu0 0.0
  %958 = vmatpush1.msra.mxu0 0.0
  %959 = vmatprep.subr.mxu0 0.0
  %960 = vmatpush1.msra.mxu0 0.0
  %961 = vmatprep.subr.mxu0 0.0
  %962 = vmatpush1.msra.mxu0 0.0
  %963 = vmatprep.subr.mxu0 0.0
  %964 = vmatpush1.msra.mxu0 0.0
  %965 = vmatprep.mubr.f32.mxu0 0.0
  %966 = vmatmul.mubr.f32.gmra.mrb[0].mxu0 %v890
  %v967 = vpop.f32.mrb[0].mxu0
  %v968 = vadd.f32 0.0, %v967
  %v969 = vpop.f32.mrb[0].mxu0
  %970 = vmatprep.mubr.f32.mxu0 0.0
  %971 = vmatmul.mubr.f32.gmra.mrb[0].mxu0 %v893
  %v972 = vpop.f32.mrb[0].mxu0
  %v973 = vadd.f32 0.0, %v972
  %v974 = vpop.f32.mrb[0].mxu0
  %975 = vmatprep.mubr.f32.mxu0 0.0
  %976 = vmatmul.mubr.f32.gmra.mrb[0].mxu0 %v896
  %v977 = vpop.f32.mrb[0].mxu0
  %v978 = vadd.f32 0.0, %v977
  %v979 = vpop.f32.mrb[0].mxu0
  %980 = vmatprep.mubr.f32.mxu0 0.0
  %981 = vmatmul.mubr.f32.gmra.mrb[0].mxu0 %v899
  %v982 = vpop.f32.mrb[0].mxu0
  %v983 = vadd.f32 0.0, %v982
  %v984 = vpop.f32.mrb[0].mxu0
  %985 = vdwg.mxu0
  %990 = vrot.lane.b32.xlu0 %v582, 8
  %v991 = vpop.permute.xlu0 %990
  %992 = vrot.lane.b32.xlu0 %v587, 8
  %v993 = vpop.permute.xlu0 %992
  %994 = vrot.lane.b32.xlu0 %v592, 8
  %v995 = vpop.permute.xlu0 %994
  %996 = vrot.lane.b32.xlu0 %v597, 8
  %v997 = vpop.permute.xlu0 %996
  %1006 = vrot.lane.b32.xlu0 %v775, 16
  %v1007 = vpop.permute.xlu0 %1006
  %1008 = vrot.lane.b32.xlu0 %v780, 16
  %v1009 = vpop.permute.xlu0 %1008
  %1010 = vrot.lane.b32.xlu0 %v785, 16
  %v1011 = vpop.permute.xlu0 %1010
  %1012 = vrot.lane.b32.xlu0 %v790, 16
  %v1013 = vpop.permute.xlu0 %1012
  %1022 = vrot.lane.b32.xlu0 %v968, 24
  %v1023 = vpop.permute.xlu0 %1022
  %1024 = vrot.lane.b32.xlu0 %v973, 24
  %v1025 = vpop.permute.xlu0 %1024
  %1026 = vrot.lane.b32.xlu0 %v978, 24
  %v1027 = vpop.permute.xlu0 %1026
  %1028 = vrot.lane.b32.xlu0 %v983, 24
  %v1029 = vpop.permute.xlu0 %1028
  %vm1034 = vcmask 64512
  %v1035 = vsel %vm1034, %v389, %v991
  %v1036 = vsel %vm1034, %v394, %v993
  %v1037 = vsel %vm1034, %v399, %v995
  %v1038 = vsel %vm1034, %v404, %v997
  %v1039 = vsel %vm29, %v1035, %v1007
  %v1040 = vsel %vm29, %v1036, %v1009
  %v1041 = vsel %vm29, %v1037, %v1011
  %v1042 = vsel %vm29, %v1038, %v1013
  %vm1043 = vcmask 195584
  %v1044 = vsel %vm1043, %v1039, %v1023
  %v1045 = vsel %vm1043, %v1040, %v1025
  %v1046 = vsel %vm1043, %v1041, %v1027
  %v1047 = vsel %vm1043, %v1042, %v1029
  %v1048 = vld [vmem:[%s4] sm:$0x1]
  %v1050 = vlaneseq
  %v1051 = vshrl.u32 %v1050, 7
  %v1052 = vsub.s32 0, %v1051
  %v1053 = vrot.slane %v1048, %v1052
  %v1055 = vadd.f32 %v1044, %v1053
  %v1056 = vadd.f32 %v1045, %v1053
  %v1057 = vadd.f32 %v1046, %v1053
  %v1058 = vadd.f32 %v1047, %v1053
  %v1059 = vsel %vm265, %v1055, 0.0
  %v1060 = vsel %vm265, %v1056, 0.0
  %v1061 = vsel %vm265, %v1057, 0.0
  %v1062 = vsel %vm265, %v1058, 0.0
  %1063 = vst [vmem:[%s5] sm:$0xff] %v1059
  %1064 = vst [vmem:[%s5 + $0x8] sm:$0xff] %v1060
  %1065 = vst [vmem:[%s5 + $0x10] sm:$0xff] %v1061
  %1066 = vst [vmem:[%s5 + $0x18] sm:$0xff] %v1062
  // Predicated region
  $region22: #{gat_forward.2} parent=0 // pred_check
    _
  $region23: #{gat_forward.2} parent=0 // pred_check_branch
    %1068 = sbr.rel (0) target = $region25
  $region24: #{gat_forward.2} parent=0 // pred_region
    _
  $region25: #{gat_forward.2} parent=0 // pred_fallthru
    _
  // Predicated region
  $region26: #{gat_forward.2} parent=0 // pred_check
    _
  $region27: #{gat_forward.2} parent=0 // pred_check_branch
    %1070 = sbr.rel (0) target = $region29
  $region28: #{gat_forward.2} parent=0 // pred_region
    _
  $region29: #{gat_forward.2} parent=0 // pred_fallthru
    _

</llo_original>
